<compile_context>
chip_gen: v6e
topology: v6e:2x2x1
jax: 0.10.0
libtpu: 0.0.40
codegen_flags: <defaults>
</compile_context>

<pallas_src>
import functools

import jax
import jax.numpy as jnp
from jax import lax
from jax.experimental import pallas as pl
from jax.experimental.pallas import tpu as pltpu


OUT_CHANNELS = 8                      # FPN out_channels
DEC_CH = OUT_CHANNELS * 2             # BasicBlock channels (cat of A and B)
BLOCK_STRIDES = [1, 2, 2, 2, 1, 2, 1]
BLOCK_CHANNELS = [8, 16, 16, 24, 24, 32, 32]
STEM_CH = 8

PALLAS_MIN_P = 128                    # below 128 lanes, stores are masked and
                                      # launch overhead dominates -> use XLA
VMEM_LIMIT = 32 * 1024 * 1024


def _halo_for(width):
    # Flat-spatial halo: must be >= W+1 (one image row + 1) and a multiple of
    # 128 so the interior store into the padded scratch is lane-aligned.
    return ((width + 1 + 127) // 128) * 128


# --------------------------- Pallas kernels ---------------------------------

def _fused_basic_block_kernel(*refs, H, W, halo, has_add, has_scale):
    """Fused mmcv BasicBlock (+ optional decoder epilogue), one batch element.

    refs: x, w1t, b1, w2t, b2, [add], [scale], out, xpad_scratch, ypad_scratch
      x    : (1, C, P) f32            flat NCHW input (unpadded)
      w1t  : (C, 9*C) bf16            conv1 weights, tap-major columns
      b1   : (C, 1)   f32             folded-BN bias 1
      w2t  : (C, 9*C) bf16            conv2 weights
      b2   : (C, 1)   f32             folded-BN bias 2
      add  : (1, C, P) f32            optional post-ReLU additive term
      scale: (1, 1, P) f32            optional post-ReLU multiplicative term
      out  : (1, C, P) f32            lane-dense (P on lanes)
      xpad : (C, P + 2*halo) bf16     VMEM scratch, zero-haloed conv1 source
      ypad : (C, P + 2*halo) bf16     VMEM scratch, zero-haloed conv2 source
    """
    x_ref, w1_ref, b1_ref, w2_ref, b2_ref = refs[:5]
    i = 5
    add_ref = refs[i] if has_add else None
    i += int(has_add)
    scale_ref = refs[i] if has_scale else None
    i += int(has_scale)
    o_ref, xpad_ref, ypad_ref = refs[i], refs[i + 1], refs[i + 2]

    C = x_ref.shape[1]
    P = H * W
    Ppad = P + 2 * halo

    # Zero only the halo strips (the interiors are fully overwritten below).
    # Done every grid step -- it is cheap (4 strips of (C, halo) bf16) and
    # keeps correctness independent of how the 'parallel' batch axis is
    # split across TensorCores (each core has its own scratch).
    halo_zeros = jnp.zeros((C, halo), jnp.bfloat16)
    xpad_ref[:, :halo] = halo_zeros
    xpad_ref[:, halo + P:] = halo_zeros
    ypad_ref[:, :halo] = halo_zeros
    ypad_ref[:, halo + P:] = halo_zeros

    # Stage the input into the zero-haloed bf16 scratch (pad in VMEM, never in
    # HBM).  The f32 original is kept only for the identity residual.
    x_f32 = x_ref[0]                                     # (C, P) f32
    xpad_ref[:, halo:halo + P] = x_f32.astype(jnp.bfloat16)

    # Source-side column-validity masks over the padded width, built once and
    # shared by both convs:
    #   * a source pixel in the LAST image column must not feed a dx=-1 tap
    #     (it would be read as the "left neighbour" of the next row's col 0);
    #   * a source pixel in the FIRST image column must not feed a dx=+1 tap.
    colp = (lax.broadcasted_iota(jnp.int32, (1, Ppad), 1) - halo) % W
    m_not_last = colp != (W - 1)      # sources feeding dx = -1 taps
    m_not_first = colp != 0           # sources feeding dx = +1 taps

    def conv_taps(src):
        # src: (C, Ppad) bf16, zero in the halos.  2 selects per conv total;
        # the 9 taps themselves are plain static slices.
        zero = jnp.zeros_like(src)
        src_l = jnp.where(m_not_last, src, zero)     # for dx = -1 taps
        src_r = jnp.where(m_not_first, src, zero)    # for dx = +1 taps
        parts = []
        for dy in (-1, 0, 1):
            s = halo + dy * W
            parts.append(src_l[:, s - 1:s - 1 + P])  # dx = -1
            parts.append(src[:, s:s + P])            # dx =  0
            parts.append(src_r[:, s + 1:s + 1 + P])  # dx = +1
        # (9*C, P) bf16 MXU operand (accumulation stays f32).
        return jnp.concatenate(parts, axis=0)

    # conv1 + folded BN + ReLU.  The intermediate only feeds conv2's bf16 MXU
    # operand, so staging it as bf16 loses no additional precision.
    y = jnp.dot(w1_ref[...], conv_taps(xpad_ref[...]),
                preferred_element_type=jnp.float32)
    y = jnp.maximum(y + b1_ref[...], 0.0)
    ypad_ref[:, halo:halo + P] = y.astype(jnp.bfloat16)

    # conv2 + folded BN + identity residual + ReLU
    z = jnp.dot(w2_ref[...], conv_taps(ypad_ref[...]),
                preferred_element_type=jnp.float32)
    z = jnp.maximum(z + b2_ref[...] + x_f32, 0.0)

    # Fused decoder epilogue.
    if has_add:
        z = z + add_ref[0]
    if has_scale:
        z = z * scale_ref[0]
    o_ref[0] = z.astype(o_ref.dtype)


def _dist_sigmoid_kernel(a_ref, b_ref, o_ref):
    # a, b: (N, C, P) f32  ->  o: (N, P) = sigmoid(||a - b||_c / global_max)
    diff = a_ref[...] - b_ref[...]
    d = jnp.sqrt(jnp.sum(diff * diff, axis=1))          # (N, P), f32
    m = jnp.max(d, axis=-1, keepdims=True)              # (N, 1) per-batch max
    m = jnp.max(m, axis=0, keepdims=True)               # (1, 1) global max
    m = jnp.maximum(m, 1e-12)   # guard 0/0 -> NaN when A == B (torch would NaN)
    v = d * pl.reciprocal(m, approx=True)               # EUP, not VPU divide
    o_ref[...] = pl.reciprocal(1.0 + jnp.exp(-v), approx=True)


# --------------------------- XLA fallbacks (tiny levels) ---------------------

def _basic_block_xla(x, p, add=None, scale=None):
    dn = ('NCHW', 'HWIO', 'NCHW')
    y = lax.conv_general_dilated(x, p['w1'], (1, 1), 'SAME',
                                 dimension_numbers=dn)
    y = jax.nn.relu(y + p['b1'][None, :, None, None])
    z = lax.conv_general_dilated(y, p['w2'], (1, 1), 'SAME',
                                 dimension_numbers=dn)
    z = jax.nn.relu(z + p['b2'][None, :, None, None] + x)
    if add is not None:
        z = z + add
    if scale is not None:
        z = z * scale
    return z


def _euclidean_distance_xla(a, b):
    d = jnp.sqrt(jnp.sum((a - b) ** 2, axis=1, keepdims=True))
    m = jnp.maximum(jnp.max(d), 1e-12)
    return jax.nn.sigmoid(d / m)


# --------------------------- Pallas wrappers ---------------------------------

def basic_block(x, p, add=None, scale=None):
    """mmcv BasicBlock (folded BN) with a fused decoder epilogue.

    x: (N, C, H, W); add: (N, C, H, W) or None; scale: (N, 1, H, W) or None.
    Semantics: out = relu(conv2(relu(conv1(x)+b1))+b2+x); out += add; out *= scale.
    """
    N, C, H, W = x.shape
    P = H * W
    if P < PALLAS_MIN_P:
        # tiny levels are launch-overhead bound -> plain XLA
        return _basic_block_xla(x, p, add, scale)

    halo = _halo_for(W)
    Ppad = P + 2 * halo

    in_specs = [
        pl.BlockSpec((1, C, P), lambda n: (n, 0, 0)),     # unpadded input
        pl.BlockSpec((C, 9 * C), lambda n: (0, 0)),
        pl.BlockSpec((C, 1), lambda n: (0, 0)),
        pl.BlockSpec((C, 9 * C), lambda n: (0, 0)),
        pl.BlockSpec((C, 1), lambda n: (0, 0)),
    ]
    args = [x.reshape(N, C, P), p['w1t'], p['b1'].reshape(C, 1),
            p['w2t'], p['b2'].reshape(C, 1)]
    if add is not None:
        in_specs.append(pl.BlockSpec((1, C, P), lambda n: (n, 0, 0)))
        args.append(add.reshape(N, C, P))
    if scale is not None:
        in_specs.append(pl.BlockSpec((1, 1, P), lambda n: (n, 0, 0)))
        args.append(scale.reshape(N, 1, P))

    out = pl.pallas_call(
        functools.partial(_fused_basic_block_kernel, H=H, W=W, halo=halo,
                          has_add=add is not None, has_scale=scale is not None),
        out_shape=jax.ShapeDtypeStruct((N, C, P), jnp.float32),
        grid=(N,),
        in_specs=in_specs,
        out_specs=pl.BlockSpec((1, C, P), lambda n: (n, 0, 0)),
        scratch_shapes=[pltpu.VMEM((C, Ppad), jnp.bfloat16),   # xpad
                        pltpu.VMEM((C, Ppad), jnp.bfloat16)],  # ypad
        compiler_params=pltpu.CompilerParams(
            dimension_semantics=("parallel",),      # batch axis -> both v7x TCs
            vmem_limit_bytes=VMEM_LIMIT),
    )(*args)
    return out.reshape(N, C, H, W)


def euclidean_distance(a, b):
    """torch: sigmoid(sqrt(sum_c (a-b)^2) / max(.)) -> (N, 1, H, W), all f32."""
    N, C, H, W = a.shape
    P = H * W
    if P < PALLAS_MIN_P:
        return _euclidean_distance_xla(a, b)
    # TODO(synk): for the dec1[6]-style case this could be fused into the
    #   BasicBlock epilogue (diff of the two channel halves of the cat input);
    #   at these sizes that level takes the XLA path anyway.
    d = pl.pallas_call(
        _dist_sigmoid_kernel,
        out_shape=jax.ShapeDtypeStruct((N, P), jnp.float32),
        in_specs=[pl.BlockSpec(memory_space=pltpu.MemorySpace.VMEM),
                  pl.BlockSpec(memory_space=pltpu.MemorySpace.VMEM)],
        out_specs=pl.BlockSpec(memory_space=pltpu.MemorySpace.VMEM),
        compiler_params=pltpu.CompilerParams(vmem_limit_bytes=VMEM_LIMIT),
    )(a.reshape(N, C, P), b.reshape(N, C, P))
    return d.reshape(N, 1, H, W)


# --------------------------- JAX glue ----------------------------------------

def upsample2x(x):
    # F.interpolate(scale_factor=2, mode='bilinear', align_corners=False)
    N, C, H, W = x.shape
    return jax.image.resize(x, (N, C, 2 * H, 2 * W), method='bilinear')


def conv_bn_relu(x, w, b, stride):
    y = lax.conv_general_dilated(x, w, (stride, stride), 'SAME',
                                 dimension_numbers=('NCHW', 'HWIO', 'NCHW'))
    return jax.nn.relu(y + b[None, :, None, None])


def backbone(x, p):
    x = conv_bn_relu(x, p['stem_w'], p['stem_b'], 2)
    feats = []
    for bw, bb, s in zip(p['blk_w'], p['blk_b'], BLOCK_STRIDES):
        x = conv_bn_relu(x, bw, bb, s)
        feats.append(x)
    return feats


def fpn(feats, p):
    return [jnp.einsum('nchw,cd->ndhw', f, w) + b[None, :, None, None]
            for f, w, b in zip(feats, p['w'], p['b'])]


def change_feature(xs, ys):
    xs, ys = list(xs), list(ys)
    for i in range(0, len(xs), 2):
        xs[i], ys[i] = ys[i], xs[i]
    return xs, ys


def cdnet_forward(xA, xB, params):
    # xA, xB: NCHW, same convention as the PyTorch module
    fA = backbone(xA, params['backbone'])
    fB = backbone(xB, params['backbone'])
    fA, fB = change_feature(fA, fB)
    fA = fpn(fA, params['fpnA'])
    fB = fpn(fB, params['fpnB'])
    fA, fB = change_feature(fA, fB)

    dec1, dec2 = params['dec1'], params['dec2']
    change_map = []

    cat6 = jnp.concatenate([fA[6], fB[6]], axis=1)
    cur6 = basic_block(cat6, dec1[6], scale=euclidean_distance(fA[6], fB[6]))
    change_map.append(cur6)

    cat5 = jnp.concatenate([fA[5], fB[5]], axis=1)
    cur5 = basic_block(cat5, dec1[5], add=cur6)
    cur5 = upsample2x(cur5)
    d5 = upsample2x(euclidean_distance(fA[5], fB[5]))
    cur5 = basic_block(cur5, dec2[5], scale=d5)
    change_map.append(cur5)

    cat4 = jnp.concatenate([fA[4], fB[4]], axis=1)
    cur4 = basic_block(cat4, dec1[4], add=cur5)
    cur4 = basic_block(cur4, dec2[4], scale=euclidean_distance(fA[4], fB[4]))
    change_map.append(cur4)

    cat3 = jnp.concatenate([fA[3], fB[3]], axis=1)
    cur3 = basic_block(cat3, dec1[3], add=cur4)
    cur3 = upsample2x(cur3)
    d3 = upsample2x(euclidean_distance(fA[3], fB[3]))
    cur3 = basic_block(cur3, dec2[3], scale=d3)
    change_map.append(cur3)

    cat2 = jnp.concatenate([fA[2], fB[2]], axis=1)
    cur2 = basic_block(cat2, dec1[2], add=cur3)
    cur2 = upsample2x(cur2)
    d2 = upsample2x(euclidean_distance(fA[2], fB[2]))
    cur2 = basic_block(cur2, dec2[2], scale=d2)
    change_map.append(cur2)

    cat1 = jnp.concatenate([fA[1], fB[1]], axis=1)
    cur1 = basic_block(cat1, dec1[1], add=cur2)
    cur1 = upsample2x(cur1)
    d1 = upsample2x(euclidean_distance(fA[1], fB[1]))
    cur1 = basic_block(cur1, dec2[1], scale=d1)
    change_map.append(cur1)

    return change_map


# --------------------------- parameter init ---------------------------------

def init_params(key):
    keys = iter(jax.random.split(key, 256))

    def nk():
        return next(keys)

    def conv_w(cin, cout, k=3):
        std = (2.0 / (k * k * cin)) ** 0.5
        return std * jax.random.normal(nk(), (k, k, cin, cout), jnp.float32)

    def bn(c):
        gamma = 1.0 + 0.1 * jax.random.normal(nk(), (c,), jnp.float32)
        beta = 0.1 * jax.random.normal(nk(), (c,), jnp.float32)
        mean = 0.1 * jax.random.normal(nk(), (c,), jnp.float32)
        var = jax.random.uniform(nk(), (c,), jnp.float32, 0.5, 1.5)
        return gamma, beta, mean, var

    def fold(w, bnp, eps=1e-5):
        gamma, beta, mean, var = bnp
        s = gamma / jnp.sqrt(var + eps)
        return w * s, beta - mean * s

    backbone_p = {
        'stem_w': conv_w(3, STEM_CH),
        'stem_b': 0.01 * jax.random.normal(nk(), (STEM_CH,), jnp.float32),
        'blk_w': [], 'blk_b': [],
    }
    cin = STEM_CH
    for cout in BLOCK_CHANNELS:
        backbone_p['blk_w'].append(conv_w(cin, cout))
        backbone_p['blk_b'].append(
            0.01 * jax.random.normal(nk(), (cout,), jnp.float32))
        cin = cout

    def fpn_params():
        p = {'w': [], 'b': []}
        for c in BLOCK_CHANNELS:
            p['w'].append((1.0 / c ** 0.5) *
                          jax.random.normal(nk(), (c, OUT_CHANNELS), jnp.float32))
            p['b'].append(
                0.01 * jax.random.normal(nk(), (OUT_CHANNELS,), jnp.float32))
        return p

    def mxu_weight(w):
        # (3,3,Cin,Cout) HWIO -> (Cout, 9*Cin), tap-major ((dy,dx) row-major,
        # Cin fastest) bf16 operand matching the in-kernel tap ordering.
        co = w.shape[-1]
        return jnp.transpose(w, (3, 0, 1, 2)).reshape(co, -1).astype(jnp.bfloat16)

    def basic_block_params():
        w1, b1 = fold(conv_w(DEC_CH, DEC_CH), bn(DEC_CH))
        w2, b2 = fold(conv_w(DEC_CH, DEC_CH), bn(DEC_CH))
        return {'w1': w1, 'b1': b1, 'w2': w2, 'b2': b2,
                'w1t': mxu_weight(w1), 'w2t': mxu_weight(w2)}

    return {
        'backbone': backbone_p,
        'fpnA': fpn_params(),
        'fpnB': fpn_params(),
        'dec1': [basic_block_params() for _ in range(7)],
        'dec2': [basic_block_params() for _ in range(7)],
    }


# ------------------------------ main -----------------------------------------

if __name__ == "__main__":
    key = jax.random.PRNGKey(0)
    kp, ka, kb, kt, ku = jax.random.split(key, 5)
    params = init_params(kp)

    # --- unit checks: Pallas kernels vs plain-XLA references (tolerance) ----
    xt = jax.random.normal(kt, (2, DEC_CH, 16, 16), jnp.float32)
    addt = jax.random.normal(ku, (2, DEC_CH, 16, 16), jnp.float32)
    scalet = jax.nn.sigmoid(jax.random.normal(ku, (2, 1, 16, 16), jnp.float32))
    bp = params['dec1'][1]
    got = jax.block_until_ready(basic_block(xt, bp, add=addt, scale=scalet))
    ref = _basic_block_xla(xt, bp, add=addt, scale=scalet)
    # bf16 MXU operands vs f32 XLA conv -> loose-but-meaningful tolerance.
    assert jnp.allclose(got, ref, atol=0.15, rtol=0.1), \
        float(jnp.max(jnp.abs(got - ref)))

    da = jax.random.normal(ka, (2, OUT_CHANNELS, 16, 16), jnp.float32)
    db = jax.random.normal(kb, (2, OUT_CHANNELS, 16, 16), jnp.float32)
    got_d = jax.block_until_ready(euclidean_distance(da, db))
    ref_d = _euclidean_distance_xla(da, db)
    assert jnp.allclose(got_d, ref_d, atol=2e-2, rtol=2e-2), \
        float(jnp.max(jnp.abs(got_d - ref_d)))

    # --- full CDNet forward --------------------------------------------------
    # NCHW inputs, like the PyTorch module
    xA = jax.random.normal(ka, (2, 3, 64, 64), jnp.float32)
    xB = jax.random.normal(kb, (2, 3, 64, 64), jnp.float32)

    fwd = jax.jit(lambda a, b: cdnet_forward(a, b, params))
    outs = jax.block_until_ready(fwd(xA, xB))

    assert len(outs) == 6
    expected = [(2, 16, 2, 2), (2, 16, 4, 4), (2, 16, 4, 4),
                (2, 16, 8, 8), (2, 16, 16, 16), (2, 16, 32, 32)]
    for o, e in zip(outs, expected):
        assert o.shape == e, (o.shape, e)
        assert bool(jnp.all(jnp.isfinite(o)))
    print("KERNEL_OK")
</pallas_src>

<mosaic_0001>
module attributes {stable_mosaic.version = 11 : i64} {
  func.func @_fused_basic_block_kernel(%arg0: i32, %arg1: memref<1x16x256xf32, #tpu.memory_space<vmem>>, %arg2: memref<16x144xbf16, #tpu.memory_space<vmem>>, %arg3: memref<16x1xf32, #tpu.memory_space<vmem>>, %arg4: memref<16x144xbf16, #tpu.memory_space<vmem>>, %arg5: memref<16x1xf32, #tpu.memory_space<vmem>>, %arg6: memref<1x16x256xf32, #tpu.memory_space<vmem>>, %arg7: memref<1x1x256xf32, #tpu.memory_space<vmem>>, %arg8: memref<1x16x256xf32, #tpu.memory_space<vmem>>, %arg9: memref<16x512xbf16, #tpu.memory_space<vmem>>, %arg10: memref<16x512xbf16, #tpu.memory_space<vmem>>) attributes {dimension_semantics = [#tpu.dimension_semantics<parallel>], iteration_bounds = array<i64: 2>, scalar_prefetch = 0 : i64, scratch_operands = 2 : i64, tpu.core_type = #tpu.core_type<tc>, window_params = [{transform_indices = @transform_0, window_bounds = array<i64: 1, 16, 256>}, {pipeline_mode = #tpu.pipeline_mode<synchronous>, transform_indices = @transform_1, window_bounds = array<i64: 16, 144>}, {pipeline_mode = #tpu.pipeline_mode<synchronous>, transform_indices = @transform_2, window_bounds = array<i64: 16, 1>}, {pipeline_mode = #tpu.pipeline_mode<synchronous>, transform_indices = @transform_3, window_bounds = array<i64: 16, 144>}, {pipeline_mode = #tpu.pipeline_mode<synchronous>, transform_indices = @transform_4, window_bounds = array<i64: 16, 1>}, {transform_indices = @transform_5, window_bounds = array<i64: 1, 16, 256>}, {transform_indices = @transform_6, window_bounds = array<i64: 1, 1, 256>}, {transform_indices = @transform_7, window_bounds = array<i64: 1, 16, 256>}]} {
    %cst = arith.constant 0.000000e+00 : bf16
    %0 = vector.broadcast %cst : bf16 to vector<16x128xbf16>
    %c0 = arith.constant 0 : index
    %c0_0 = arith.constant 0 : index
    %1 = vector.load %arg9[%c0, %c0_0] : memref<16x512xbf16, #tpu.memory_space<vmem>>, vector<16x128xbf16>
    tpu.vector_store %arg9[%c0, %c0_0], %0 {strides = array<i32>} : memref<16x512xbf16, #tpu.memory_space<vmem>>, vector<16x128xbf16>,
    %c0_1 = arith.constant 0 : index
    %c384 = arith.constant 384 : index
    %2 = vector.load %arg9[%c0_1, %c384] : memref<16x512xbf16, #tpu.memory_space<vmem>>, vector<16x128xbf16>
    tpu.vector_store %arg9[%c0_1, %c384], %0 {strides = array<i32>} : memref<16x512xbf16, #tpu.memory_space<vmem>>, vector<16x128xbf16>,
    %c0_2 = arith.constant 0 : index
    %c0_3 = arith.constant 0 : index
    %3 = vector.load %arg10[%c0_2, %c0_3] : memref<16x512xbf16, #tpu.memory_space<vmem>>, vector<16x128xbf16>
    tpu.vector_store %arg10[%c0_2, %c0_3], %0 {strides = array<i32>} : memref<16x512xbf16, #tpu.memory_space<vmem>>, vector<16x128xbf16>,
    %c0_4 = arith.constant 0 : index
    %c384_5 = arith.constant 384 : index
    %4 = vector.load %arg10[%c0_4, %c384_5] : memref<16x512xbf16, #tpu.memory_space<vmem>>, vector<16x128xbf16>
    tpu.vector_store %arg10[%c0_4, %c384_5], %0 {strides = array<i32>} : memref<16x512xbf16, #tpu.memory_space<vmem>>, vector<16x128xbf16>,
    %c0_6 = arith.constant 0 : index
    %c0_7 = arith.constant 0 : index
    %c0_8 = arith.constant 0 : index
    %5 = vector.load %arg1[%c0_6, %c0_7, %c0_8] : memref<1x16x256xf32, #tpu.memory_space<vmem>>, vector<1x16x256xf32>
    %6 = vector.shape_cast %5 : vector<1x16x256xf32> to vector<16x256xf32>
    %7 = arith.truncf %6 : vector<16x256xf32> to vector<16x256xbf16>
    %c0_9 = arith.constant 0 : index
    %c128 = arith.constant 128 : index
    %8 = vector.load %arg9[%c0_9, %c128] : memref<16x512xbf16, #tpu.memory_space<vmem>>, vector<16x256xbf16>
    tpu.vector_store %arg9[%c0_9, %c128], %7 {strides = array<i32>} : memref<16x512xbf16, #tpu.memory_space<vmem>>, vector<16x256xbf16>,
    %9 = tpu.iota {dimensions = array<i32: 1>} : vector<1x512xi32>
    %c128_i32 = arith.constant 128 : i32
    %10 = vector.broadcast %c128_i32 : i32 to vector<1x512xi32>
    %11 = arith.subi %9, %10 : vector<1x512xi32>
    %c16_i32 = arith.constant 16 : i32
    %c0_i32 = arith.constant 0 : i32
    %12 = arith.cmpi eq, %c16_i32, %c0_i32 : i32
    %c1_i32 = arith.constant 1 : i32
    %13 = arith.select %12, %c1_i32, %c16_i32 : i32
    %14 = vector.broadcast %13 : i32 to vector<1x512xi32>
    %15 = arith.remsi %11, %14 : vector<1x512xi32>
    %c0_i32_10 = arith.constant 0 : i32
    %16 = vector.broadcast %c0_i32_10 : i32 to vector<1x512xi32>
    %17 = arith.cmpi ne, %15, %16 : vector<1x512xi32>
    %c0_i32_11 = arith.constant 0 : i32
    %18 = vector.broadcast %c0_i32_11 : i32 to vector<1x512xi32>
    %19 = arith.cmpi slt, %15, %18 : vector<1x512xi32>
    %c0_i32_12 = arith.constant 0 : i32
    %20 = arith.cmpi slt, %13, %c0_i32_12 : i32
    %21 = vector.broadcast %20 : i1 to vector<1x512xi1>
    %22 = vector.broadcast %21 : vector<1x512xi1> to vector<1x512xi1>
    %23 = arith.xori %19, %22 : vector<1x512xi1>
    %24 = arith.andi %23, %17 : vector<1x512xi1>
    %25 = vector.broadcast %13 : i32 to vector<1x512xi32>
    %26 = arith.addi %15, %25 : vector<1x512xi32>
    %27 = arith.select %24, %26, %15 : vector<1x512xi1>, vector<1x512xi32>
    %c15_i32 = arith.constant 15 : i32
    %28 = vector.broadcast %c15_i32 : i32 to vector<1x512xi32>
    %29 = arith.cmpi ne, %27, %28 : vector<1x512xi32>
    %c0_i32_13 = arith.constant 0 : i32
    %30 = vector.broadcast %c0_i32_13 : i32 to vector<1x512xi32>
    %31 = arith.cmpi ne, %27, %30 : vector<1x512xi32>
    %c0_14 = arith.constant 0 : index
    %c0_15 = arith.constant 0 : index
    %32 = vector.load %arg2[%c0_14, %c0_15] : memref<16x144xbf16, #tpu.memory_space<vmem>>, vector<16x144xbf16>
    %c0_16 = arith.constant 0 : index
    %c0_17 = arith.constant 0 : index
    %33 = vector.load %arg9[%c0_16, %c0_17] : memref<16x512xbf16, #tpu.memory_space<vmem>>, vector<16x512xbf16>
    %cst_18 = arith.constant 0.000000e+00 : bf16
    %34 = vector.broadcast %cst_18 : bf16 to vector<16x512xbf16>
    %35 = vector.shape_cast %29 : vector<1x512xi1> to vector<1x512xi1>
    %36 = vector.broadcast %35 : vector<1x512xi1> to vector<16x512xi1>
    %37 = arith.select %36, %33, %34 : vector<16x512xi1>, vector<16x512xbf16>
    %38 = vector.shape_cast %31 : vector<1x512xi1> to vector<1x512xi1>
    %39 = vector.broadcast %38 : vector<1x512xi1> to vector<16x512xi1>
    %40 = arith.select %39, %33, %34 : vector<16x512xi1>, vector<16x512xbf16>
    %41 = vector.extract_strided_slice %37 {offsets = [0, 111], sizes = [16, 256], strides = [1, 1]} : vector<16x512xbf16> to vector<16x256xbf16>
    %42 = vector.extract_strided_slice %33 {offsets = [0, 112], sizes = [16, 256], strides = [1, 1]} : vector<16x512xbf16> to vector<16x256xbf16>
    %43 = vector.extract_strided_slice %40 {offsets = [0, 113], sizes = [16, 256], strides = [1, 1]} : vector<16x512xbf16> to vector<16x256xbf16>
    %44 = vector.extract_strided_slice %37 {offsets = [0, 127], sizes = [16, 256], strides = [1, 1]} : vector<16x512xbf16> to vector<16x256xbf16>
    %45 = vector.extract_strided_slice %33 {offsets = [0, 128], sizes = [16, 256], strides = [1, 1]} : vector<16x512xbf16> to vector<16x256xbf16>
    %46 = vector.extract_strided_slice %40 {offsets = [0, 129], sizes = [16, 256], strides = [1, 1]} : vector<16x512xbf16> to vector<16x256xbf16>
    %47 = vector.extract_strided_slice %37 {offsets = [0, 143], sizes = [16, 256], strides = [1, 1]} : vector<16x512xbf16> to vector<16x256xbf16>
    %48 = vector.extract_strided_slice %33 {offsets = [0, 144], sizes = [16, 256], strides = [1, 1]} : vector<16x512xbf16> to vector<16x256xbf16>
    %49 = vector.extract_strided_slice %40 {offsets = [0, 145], sizes = [16, 256], strides = [1, 1]} : vector<16x512xbf16> to vector<16x256xbf16>
    %50 = tpu.concatenate %41, %42, %43, %44, %45, %46, %47, %48, %49 in 0 : vector<16x256xbf16>, vector<16x256xbf16>, vector<16x256xbf16>, vector<16x256xbf16>, vector<16x256xbf16>, vector<16x256xbf16>, vector<16x256xbf16>, vector<16x256xbf16>, vector<16x256xbf16> -> vector<144x256xbf16>
    %cst_19 = arith.constant dense<0.000000e+00> : vector<16x256xf32>
    %51 = tpu.matmul %32, %50, %cst_19 {dimension_numbers = #tpu.dot_dimension_numbers<[1], [0], [0], [1], [0, 0, 1, 1], [], []>} : vector<16x144xbf16>, vector<144x256xbf16>, vector<16x256xf32> -> vector<16x256xf32>
    %c0_20 = arith.constant 0 : index
    %c0_21 = arith.constant 0 : index
    %52 = vector.load %arg3[%c0_20, %c0_21] : memref<16x1xf32, #tpu.memory_space<vmem>>, vector<16x1xf32>
    %53 = vector.broadcast %52 : vector<16x1xf32> to vector<16x256xf32>
    %54 = arith.addf %51, %53 : vector<16x256xf32>
    %cst_22 = arith.constant 0.000000e+00 : f32
    %55 = vector.broadcast %cst_22 : f32 to vector<16x256xf32>
    %56 = arith.maximumf %54, %55 : vector<16x256xf32>
    %57 = arith.truncf %56 : vector<16x256xf32> to vector<16x256xbf16>
    %c0_23 = arith.constant 0 : index
    %c128_24 = arith.constant 128 : index
    %58 = vector.load %arg10[%c0_23, %c128_24] : memref<16x512xbf16, #tpu.memory_space<vmem>>, vector<16x256xbf16>
    tpu.vector_store %arg10[%c0_23, %c128_24], %57 {strides = array<i32>} : memref<16x512xbf16, #tpu.memory_space<vmem>>, vector<16x256xbf16>,
    %c0_25 = arith.constant 0 : index
    %c0_26 = arith.constant 0 : index
    %59 = vector.load %arg4[%c0_25, %c0_26] : memref<16x144xbf16, #tpu.memory_space<vmem>>, vector<16x144xbf16>
    %c0_27 = arith.constant 0 : index
    %c0_28 = arith.constant 0 : index
    %60 = vector.load %arg10[%c0_27, %c0_28] : memref<16x512xbf16, #tpu.memory_space<vmem>>, vector<16x512xbf16>
    %cst_29 = arith.constant 0.000000e+00 : bf16
    %61 = vector.broadcast %cst_29 : bf16 to vector<16x512xbf16>
    %62 = vector.shape_cast %29 : vector<1x512xi1> to vector<1x512xi1>
    %63 = vector.broadcast %62 : vector<1x512xi1> to vector<16x512xi1>
    %64 = arith.select %63, %60, %61 : vector<16x512xi1>, vector<16x512xbf16>
    %65 = vector.shape_cast %31 : vector<1x512xi1> to vector<1x512xi1>
    %66 = vector.broadcast %65 : vector<1x512xi1> to vector<16x512xi1>
    %67 = arith.select %66, %60, %61 : vector<16x512xi1>, vector<16x512xbf16>
    %68 = vector.extract_strided_slice %64 {offsets = [0, 111], sizes = [16, 256], strides = [1, 1]} : vector<16x512xbf16> to vector<16x256xbf16>
    %69 = vector.extract_strided_slice %60 {offsets = [0, 112], sizes = [16, 256], strides = [1, 1]} : vector<16x512xbf16> to vector<16x256xbf16>
    %70 = vector.extract_strided_slice %67 {offsets = [0, 113], sizes = [16, 256], strides = [1, 1]} : vector<16x512xbf16> to vector<16x256xbf16>
    %71 = vector.extract_strided_slice %64 {offsets = [0, 127], sizes = [16, 256], strides = [1, 1]} : vector<16x512xbf16> to vector<16x256xbf16>
    %72 = vector.extract_strided_slice %60 {offsets = [0, 128], sizes = [16, 256], strides = [1, 1]} : vector<16x512xbf16> to vector<16x256xbf16>
    %73 = vector.extract_strided_slice %67 {offsets = [0, 129], sizes = [16, 256], strides = [1, 1]} : vector<16x512xbf16> to vector<16x256xbf16>
    %74 = vector.extract_strided_slice %64 {offsets = [0, 143], sizes = [16, 256], strides = [1, 1]} : vector<16x512xbf16> to vector<16x256xbf16>
    %75 = vector.extract_strided_slice %60 {offsets = [0, 144], sizes = [16, 256], strides = [1, 1]} : vector<16x512xbf16> to vector<16x256xbf16>
    %76 = vector.extract_strided_slice %67 {offsets = [0, 145], sizes = [16, 256], strides = [1, 1]} : vector<16x512xbf16> to vector<16x256xbf16>
    %77 = tpu.concatenate %68, %69, %70, %71, %72, %73, %74, %75, %76 in 0 : vector<16x256xbf16>, vector<16x256xbf16>, vector<16x256xbf16>, vector<16x256xbf16>, vector<16x256xbf16>, vector<16x256xbf16>, vector<16x256xbf16>, vector<16x256xbf16>, vector<16x256xbf16> -> vector<144x256xbf16>
    %cst_30 = arith.constant dense<0.000000e+00> : vector<16x256xf32>
    %78 = tpu.matmul %59, %77, %cst_30 {dimension_numbers = #tpu.dot_dimension_numbers<[1], [0], [0], [1], [0, 0, 1, 1], [], []>} : vector<16x144xbf16>, vector<144x256xbf16>, vector<16x256xf32> -> vector<16x256xf32>
    %c0_31 = arith.constant 0 : index
    %c0_32 = arith.constant 0 : index
    %79 = vector.load %arg5[%c0_31, %c0_32] : memref<16x1xf32, #tpu.memory_space<vmem>>, vector<16x1xf32>
    %80 = vector.broadcast %79 : vector<16x1xf32> to vector<16x256xf32>
    %81 = arith.addf %78, %80 : vector<16x256xf32>
    %82 = arith.addf %81, %6 : vector<16x256xf32>
    %cst_33 = arith.constant 0.000000e+00 : f32
    %83 = vector.broadcast %cst_33 : f32 to vector<16x256xf32>
    %84 = arith.maximumf %82, %83 : vector<16x256xf32>
    %c0_34 = arith.constant 0 : index
    %c0_35 = arith.constant 0 : index
    %c0_36 = arith.constant 0 : index
    %85 = vector.load %arg6[%c0_34, %c0_35, %c0_36] : memref<1x16x256xf32, #tpu.memory_space<vmem>>, vector<1x16x256xf32>
    %86 = vector.shape_cast %85 : vector<1x16x256xf32> to vector<16x256xf32>
    %87 = arith.addf %84, %86 : vector<16x256xf32>
    %c0_37 = arith.constant 0 : index
    %c0_38 = arith.constant 0 : index
    %c0_39 = arith.constant 0 : index
    %88 = vector.load %arg7[%c0_37, %c0_38, %c0_39] : memref<1x1x256xf32, #tpu.memory_space<vmem>>, vector<1x1x256xf32>
    %89 = vector.shape_cast %88 : vector<1x1x256xf32> to vector<1x256xf32>
    %90 = vector.broadcast %89 : vector<1x256xf32> to vector<16x256xf32>
    %91 = arith.mulf %87, %90 : vector<16x256xf32>
    %c0_40 = arith.constant 0 : index
    %c0_41 = arith.constant 0 : index
    %c0_42 = arith.constant 0 : index
    %92 = vector.load %arg8[%c0_40, %c0_41, %c0_42] : memref<1x16x256xf32, #tpu.memory_space<vmem>>, vector<1x16x256xf32>
    %93 = vector.shape_cast %92 : vector<1x16x256xf32> to vector<16x256xf32>
    %94 = vector.shape_cast %91 : vector<16x256xf32> to vector<1x16x256xf32>
    tpu.vector_store %arg8[%c0_40, %c0_41, %c0_42], %94 {strides = array<i32>} : memref<1x16x256xf32, #tpu.memory_space<vmem>>, vector<1x16x256xf32>,
    return
  }
  func.func @transform_0(%arg0: i32) -> (i32, i32, i32) {
    %c0_i32 = arith.constant 0 : i32
    %c0_i32_0 = arith.constant 0 : i32
    %c0_i32_1 = arith.constant 0 : i32
    return %arg0, %c0_i32, %c0_i32_0 : i32, i32, i32
  }
  func.func @transform_1(%arg0: i32) -> (i32, i32) {
    %c0_i32 = arith.constant 0 : i32
    %c0_i32_0 = arith.constant 0 : i32
    %c0_i32_1 = arith.constant 0 : i32
    return %c0_i32, %c0_i32_0 : i32, i32
  }
  func.func @transform_2(%arg0: i32) -> (i32, i32) {
    %c0_i32 = arith.constant 0 : i32
    %c0_i32_0 = arith.constant 0 : i32
    %c0_i32_1 = arith.constant 0 : i32
    return %c0_i32, %c0_i32_0 : i32, i32
  }
  func.func @transform_3(%arg0: i32) -> (i32, i32) {
    %c0_i32 = arith.constant 0 : i32
    %c0_i32_0 = arith.constant 0 : i32
    %c0_i32_1 = arith.constant 0 : i32
    return %c0_i32, %c0_i32_0 : i32, i32
  }
  func.func @transform_4(%arg0: i32) -> (i32, i32) {
    %c0_i32 = arith.constant 0 : i32
    %c0_i32_0 = arith.constant 0 : i32
    %c0_i32_1 = arith.constant 0 : i32
    return %c0_i32, %c0_i32_0 : i32, i32
  }
  func.func @transform_5(%arg0: i32) -> (i32, i32, i32) {
    %c0_i32 = arith.constant 0 : i32
    %c0_i32_0 = arith.constant 0 : i32
    %c0_i32_1 = arith.constant 0 : i32
    return %arg0, %c0_i32, %c0_i32_0 : i32, i32, i32
  }
  func.func @transform_6(%arg0: i32) -> (i32, i32, i32) {
    %c0_i32 = arith.constant 0 : i32
    %c0_i32_0 = arith.constant 0 : i32
    %c0_i32_1 = arith.constant 0 : i32
    return %arg0, %c0_i32, %c0_i32_0 : i32, i32, i32
  }
  func.func @transform_7(%arg0: i32) -> (i32, i32, i32) {
    %c0_i32 = arith.constant 0 : i32
    %c0_i32_0 = arith.constant 0 : i32
    %c0_i32_1 = arith.constant 0 : i32
    return %arg0, %c0_i32, %c0_i32_0 : i32, i32, i32
  }
}

</mosaic_0001>

<llo_original>
// kernel: tpu_custom_call.1
$region0: #{tpu_custom_call.1}
  #allocation0 [shape = 'u32[]', space=smem, size = 0x4, offset = 0x4, fixed_abs, tag = 'smem constant byte address 0x4 - core index']
  #allocation1 [shape = 'u32[144,128]{1,0:T(1,128)}', space=vmem, size = 0x12000, scoped, tag = 'internal scratch']
  #allocation2 [shape = 'bf16[16,512]{1,0:T(8,128)(2,1)}', space=vmem, size = 0x4000, scoped, tag = 'scratch operand']
  #allocation3 [shape = 'bf16[16,512]{1,0:T(8,128)(2,1)}', space=vmem, size = 0x4000, scoped, tag = 'scratch operand']
  %s0 = inlined_call_operand.hbm [shape: f32[2,16,256], index: 0, kind: input, shape index: {}]
  %s1 = inlined_call_operand.vmem [shape: bf16[16,144], index: 1, kind: input, shape index: {}]
  %s2 = inlined_call_operand.vmem [shape: f32[16,1], index: 2, kind: input, shape index: {}]
  %s3 = inlined_call_operand.vmem [shape: bf16[16,144], index: 3, kind: input, shape index: {}]
  %s4 = inlined_call_operand.vmem [shape: f32[16,1], index: 4, kind: input, shape index: {}]
  %s5 = inlined_call_operand.hbm [shape: f32[2,16,256], index: 5, kind: input, shape index: {}]
  %s6 = inlined_call_operand.vmem [shape: f32[2,1,256], index: 6, kind: input, shape index: {}]
  %s7 = inlined_call_operand.hbm [shape: f32[2,16,256], index: 7, kind: output, shape index: {}]
  %s8 = sld [smem:[#allocation0]]
  $region69: #{tpu_custom_call.1} parent=0
    _
  %s10 = ssub.s32 1, %s8
  %s11 = scalar_select 0, %s10, %s8
  $region1: #{tpu_custom_call.1} parent=0
    #allocation4 [shape = 'u8[32768]{0}', space=vmem, size = 0x8000, scoped, tag = 'input window, operand 0']
    #allocation5 [shape = 's32[2]{0}', space=sflag, size = 0x8, scoped, tag = 'scoped memory for tpu_custom_call.1']
    #allocation6 [shape = 's32[2]{0}', space=sflag, size = 0x8, scoped, tag = 'scoped memory for tpu_custom_call.1']
    #allocation7 [shape = 'u8[32768]{0}', space=vmem, size = 0x8000, scoped, tag = 'input window, operand 5']
    #allocation8 [shape = 's32[2]{0}', space=sflag, size = 0x8, scoped, tag = 'scoped memory for tpu_custom_call.1']
    #allocation9 [shape = 'u8[32768]{0}', space=vmem, size = 0x8000, scoped, tag = 'output window, operand 0']
    %12 = vsyncpa [#allocation5], 0
    %s13 = scalar_lea.sflag [#allocation5], 1
    %14 = vsyncpa %s13, 0
    %15 = vsyncpa [#allocation8], 0
    %s16 = scalar_lea.sflag [#allocation8], 1
    %17 = vsyncpa %s16, 0
    %18 = vsyncpa [#allocation6], 0
    %s19 = scalar_lea.sflag [#allocation6], 1
    %20 = vsyncpa %s19, 0
    loop: start=0, step=1, limit=4
    $region2: #{tpu_custom_call.1} parent=1 // loop_pre_header
      _
    $region3: #{tpu_custom_call.1} parent=1 // loop_header
      %s22 = sphi 0, %s26
      %p23 = scmp.ge.s32.totalorder %s22, 4
      %s32 = sphi 0, %s34
      %s35 = sphi 0, %s32
      %s36 = sphi 0, %s35
      %s52 = sphi 0, %s36
      %s56 = sphi 0, %s56
      %s58 = sphi 0, %s56
      %s59 = sphi 0, %s58
      %s73 = sphi 0, %s59
      %s77 = sphi 0, %s77
      %s79 = sphi 0, %s77
      %s80 = sphi 0, %s79
      %s94 = sphi 0, %s80
      %s98 = sphi 0, %s98
      %s100 = sphi 0, %s98
      %s101 = sphi 0, %s100
      %s115 = sphi 0, %s101
      %s119 = sphi 0, %s119
      %s121 = sphi 0, %s119
      %s122 = sphi 0, %s121
      %s136 = sphi 0, %s122
      %s142 = sphi 0, %s144
      %s145 = sphi 0, %s142
      %s146 = sphi 0, %s145
      %s162 = sphi 0, %s146
      %s168 = sphi 0, %s170
      %s171 = sphi 0, %s168
      %s172 = sphi 0, %s171
      %s188 = sphi 0, %s172
      %s194 = sphi 0, %s196
      %s197 = sphi 0, %s194
      %s198 = sphi 0, %s197
      %s214 = sphi 0, %s198
    $region4: #{tpu_custom_call.1} parent=1 // loop_header_branch
      %25 = sbr.rel (%p23) target = $region8
    $region5: #{tpu_custom_call.1} parent=1 // loop_body
      %s27 = ssub.s32 %s22, 1
      %s28 = ssub.s32 %s22, 2
      %s29 = sadd.s32 %s22, 1
      %s30 = ssub.s32 %s22, %s29
      %p31 = scmp.eq.s32.totalorder %s30, 0
      %s33 = sadd.s32 %s32, 1
      %s34 = scalar_select %p31, %s32, %s33
      %p37 = pneg %p31
      %p38 = scmp.eq.s32.totalorder %s22, 1
      %p39 = por %p37, %p38
      %p40 = scmp.ne.s32.totalorder %s32, %s35
      %p41 = scmp.eq.s32.totalorder %s22, 0
      %p42 = por %p40, %p41
      %p43 = scmp.ne.s32.totalorder %s32, %s35
      %p44 = scmp.eq.s32.totalorder %s27, 1
      %p45 = por %p43, %p44
      %p46 = scmp.ne.s32.totalorder %s35, %s36
      %p47 = scmp.eq.s32.totalorder %s27, 0
      %p48 = por %p46, %p47
      %p49 = scmp.ne.s32.totalorder %s35, %s36
      %p50 = scmp.eq.s32.totalorder %s28, 1
      %p51 = por %p49, %p50
      %p53 = scmp.ne.s32.totalorder %s36, %s52
      %p54 = scmp.eq.s32.totalorder %s28, 0
      %p55 = por %p53, %p54
      %s57 = sadd.s32 %s56, 1
      %p60 = scmp.eq.s32.totalorder %s22, 1
      %p61 = scmp.ne.s32.totalorder %s56, %s58
      %p62 = scmp.eq.s32.totalorder %s22, 0
      %p63 = por %p61, %p62
      %p64 = scmp.ne.s32.totalorder %s56, %s58
      %p65 = scmp.eq.s32.totalorder %s27, 1
      %p66 = por %p64, %p65
      %p67 = scmp.ne.s32.totalorder %s58, %s59
      %p68 = scmp.eq.s32.totalorder %s27, 0
      %p69 = por %p67, %p68
      %p70 = scmp.ne.s32.totalorder %s58, %s59
      %p71 = scmp.eq.s32.totalorder %s28, 1
      %p72 = por %p70, %p71
      %p74 = scmp.ne.s32.totalorder %s59, %s73
      %p75 = scmp.eq.s32.totalorder %s28, 0
      %p76 = por %p74, %p75
      %s78 = sadd.s32 %s77, 1
      %p81 = scmp.eq.s32.totalorder %s22, 1
      %p82 = scmp.ne.s32.totalorder %s77, %s79
      %p83 = scmp.eq.s32.totalorder %s22, 0
      %p84 = por %p82, %p83
      %p85 = scmp.ne.s32.totalorder %s77, %s79
      %p86 = scmp.eq.s32.totalorder %s27, 1
      %p87 = por %p85, %p86
      %p88 = scmp.ne.s32.totalorder %s79, %s80
      %p89 = scmp.eq.s32.totalorder %s27, 0
      %p90 = por %p88, %p89
      %p91 = scmp.ne.s32.totalorder %s79, %s80
      %p92 = scmp.eq.s32.totalorder %s28, 1
      %p93 = por %p91, %p92
      %p95 = scmp.ne.s32.totalorder %s80, %s94
      %p96 = scmp.eq.s32.totalorder %s28, 0
      %p97 = por %p95, %p96
      %s99 = sadd.s32 %s98, 1
      %p102 = scmp.eq.s32.totalorder %s22, 1
      %p103 = scmp.ne.s32.totalorder %s98, %s100
      %p104 = scmp.eq.s32.totalorder %s22, 0
      %p105 = por %p103, %p104
      %p106 = scmp.ne.s32.totalorder %s98, %s100
      %p107 = scmp.eq.s32.totalorder %s27, 1
      %p108 = por %p106, %p107
      %p109 = scmp.ne.s32.totalorder %s100, %s101
      %p110 = scmp.eq.s32.totalorder %s27, 0
      %p111 = por %p109, %p110
      %p112 = scmp.ne.s32.totalorder %s100, %s101
      %p113 = scmp.eq.s32.totalorder %s28, 1
      %p114 = por %p112, %p113
      %p116 = scmp.ne.s32.totalorder %s101, %s115
      %p117 = scmp.eq.s32.totalorder %s28, 0
      %p118 = por %p116, %p117
      %s120 = sadd.s32 %s119, 1
      %p123 = scmp.eq.s32.totalorder %s22, 1
      %p124 = scmp.ne.s32.totalorder %s119, %s121
      %p125 = scmp.eq.s32.totalorder %s22, 0
      %p126 = por %p124, %p125
      %p127 = scmp.ne.s32.totalorder %s119, %s121
      %p128 = scmp.eq.s32.totalorder %s27, 1
      %p129 = por %p127, %p128
      %p130 = scmp.ne.s32.totalorder %s121, %s122
      %p131 = scmp.eq.s32.totalorder %s27, 0
      %p132 = por %p130, %p131
      %p133 = scmp.ne.s32.totalorder %s121, %s122
      %p134 = scmp.eq.s32.totalorder %s28, 1
      %p135 = por %p133, %p134
      %p137 = scmp.ne.s32.totalorder %s122, %s136
      %p138 = scmp.eq.s32.totalorder %s28, 0
      %p139 = por %p137, %p138
      %s140 = ssub.s32 %s22, %s29
      %p141 = scmp.eq.s32.totalorder %s140, 0
      %s143 = sadd.s32 %s142, 1
      %s144 = scalar_select %p141, %s142, %s143
      %p147 = pneg %p141
      %p148 = scmp.eq.s32.totalorder %s22, 1
      %p149 = por %p147, %p148
      %p150 = scmp.ne.s32.totalorder %s142, %s145
      %p151 = scmp.eq.s32.totalorder %s22, 0
      %p152 = por %p150, %p151
      %p153 = scmp.ne.s32.totalorder %s142, %s145
      %p154 = scmp.eq.s32.totalorder %s27, 1
      %p155 = por %p153, %p154
      %p156 = scmp.ne.s32.totalorder %s145, %s146
      %p157 = scmp.eq.s32.totalorder %s27, 0
      %p158 = por %p156, %p157
      %p159 = scmp.ne.s32.totalorder %s145, %s146
      %p160 = scmp.eq.s32.totalorder %s28, 1
      %p161 = por %p159, %p160
      %p163 = scmp.ne.s32.totalorder %s146, %s162
      %p164 = scmp.eq.s32.totalorder %s28, 0
      %p165 = por %p163, %p164
      %s166 = ssub.s32 %s22, %s29
      %p167 = scmp.eq.s32.totalorder %s166, 0
      %s169 = sadd.s32 %s168, 1
      %s170 = scalar_select %p167, %s168, %s169
      %p173 = pneg %p167
      %p174 = scmp.eq.s32.totalorder %s22, 1
      %p175 = por %p173, %p174
      %p176 = scmp.ne.s32.totalorder %s168, %s171
      %p177 = scmp.eq.s32.totalorder %s22, 0
      %p178 = por %p176, %p177
      %p179 = scmp.ne.s32.totalorder %s168, %s171
      %p180 = scmp.eq.s32.totalorder %s27, 1
      %p181 = por %p179, %p180
      %p182 = scmp.ne.s32.totalorder %s171, %s172
      %p183 = scmp.eq.s32.totalorder %s27, 0
      %p184 = por %p182, %p183
      %p185 = scmp.ne.s32.totalorder %s171, %s172
      %p186 = scmp.eq.s32.totalorder %s28, 1
      %p187 = por %p185, %p186
      %p189 = scmp.ne.s32.totalorder %s172, %s188
      %p190 = scmp.eq.s32.totalorder %s28, 0
      %p191 = por %p189, %p190
      %s192 = ssub.s32 %s22, %s29
      %p193 = scmp.eq.s32.totalorder %s192, 0
      %s195 = sadd.s32 %s194, 1
      %s196 = scalar_select %p193, %s194, %s195
      %p199 = pneg %p193
      %p200 = scmp.eq.s32.totalorder %s22, 1
      %p201 = por %p199, %p200
      %p202 = scmp.ne.s32.totalorder %s194, %s197
      %p203 = scmp.eq.s32.totalorder %s22, 0
      %p204 = por %p202, %p203
      %p205 = scmp.ne.s32.totalorder %s194, %s197
      %p206 = scmp.eq.s32.totalorder %s27, 1
      %p207 = por %p205, %p206
      %p208 = scmp.ne.s32.totalorder %s197, %s198
      %p209 = scmp.eq.s32.totalorder %s27, 0
      %p210 = por %p208, %p209
      %p211 = scmp.ne.s32.totalorder %s197, %s198
      %p212 = scmp.eq.s32.totalorder %s28, 1
      %p213 = por %p211, %p212
      %p215 = scmp.ne.s32.totalorder %s198, %s214
      %p216 = scmp.eq.s32.totalorder %s28, 0
      %p217 = por %p215, %p216
      %p218 = scmp.le.s32.totalorder 1, %s22
      %p219 = scmp.lt.s32.totalorder %s22, 3
      %p220 = pnand %p218, %p219
      %p221 = pneg %p220
      // Predicated region
      $region9: #{tpu_custom_call.1} parent=5 // pred_check
        _
      $region10: #{tpu_custom_call.1} parent=5 // pred_check_branch
        %223 = sbr.rel (%p220) target = $region12
      $region11: #{tpu_custom_call.1} parent=5 // pred_region
        %s224 = ssub.s32 %s22, 1
        // Predicated region
        $region13: #{tpu_custom_call.1} parent=11 // pred_check
          %p225 = pneg %p69
        $region14: #{tpu_custom_call.1} parent=11 // pred_check_branch
          %227 = sbr.rel (%p225) target = $region16
        $region15: #{tpu_custom_call.1} parent=11 // pred_region
          _
        $region16: #{tpu_custom_call.1} parent=11 // pred_fallthru
          _
        // Predicated region
        $region17: #{tpu_custom_call.1} parent=11 // pred_check
          %p228 = pneg %p90
        $region18: #{tpu_custom_call.1} parent=11 // pred_check_branch
          %230 = sbr.rel (%p228) target = $region20
        $region19: #{tpu_custom_call.1} parent=11 // pred_region
          _
        $region20: #{tpu_custom_call.1} parent=11 // pred_fallthru
          _
        // Predicated region
        $region21: #{tpu_custom_call.1} parent=11 // pred_check
          %p231 = pneg %p111
        $region22: #{tpu_custom_call.1} parent=11 // pred_check_branch
          %233 = sbr.rel (%p231) target = $region24
        $region23: #{tpu_custom_call.1} parent=11 // pred_region
          _
        $region24: #{tpu_custom_call.1} parent=11 // pred_fallthru
          _
        // Predicated region
        $region25: #{tpu_custom_call.1} parent=11 // pred_check
          %p234 = pneg %p132
        $region26: #{tpu_custom_call.1} parent=11 // pred_check_branch
          %236 = sbr.rel (%p234) target = $region28
        $region27: #{tpu_custom_call.1} parent=11 // pred_region
          _
        $region28: #{tpu_custom_call.1} parent=11 // pred_fallthru
          _
      $region12: #{tpu_custom_call.1} parent=5 // pred_fallthru
        _
      %p237 = scmp.lt.s32.totalorder %s22, 2
      // Predicated region
      $region29: #{tpu_custom_call.1} parent=5 // pred_check
        %p238 = pneg %p237
      $region30: #{tpu_custom_call.1} parent=5 // pred_check_branch
        %240 = sbr.rel (%p238) target = $region32
      $region31: #{tpu_custom_call.1} parent=5 // pred_region
        // Predicated region
        $region33: #{tpu_custom_call.1} parent=31 // pred_check
          %p241 = pneg %p42
        $region34: #{tpu_custom_call.1} parent=31 // pred_check_branch
          %243 = sbr.rel (%p241) target = $region36
        $region35: #{tpu_custom_call.1} parent=31 // pred_region
          %s244 = sand.u32 %s32, 1
          %s245 = scalar_lea.sflag [#allocation5], %s244
          %s246 = sand.u32 %s32, 1
          %s247 = smul.addr %s246, 32
          %s248 = scalar_lea.vmem [#allocation4], %s247
          %s250 = ssub.s32 512, 512
          %251 = vsyncadd %s245, %s250
          %s252 = smul.addr %s22, 4
          %s253 = smul.addr %s252, 128
          %s254 = scalar_lea.hbm %s0, %s253
          %s255 = sshll.u32 %s248, 4
          %s256 = int_to_ptr.vmem [resolvable:$true] %s255
          %261 = dma.hbm_to_vmem [thread:$0]  %s254, 512, %s256, %s245, 256, 256, 16
        $region36: #{tpu_custom_call.1} parent=31 // pred_fallthru
          _
        // Predicated region
        $region37: #{tpu_custom_call.1} parent=31 // pred_check
          %p262 = pneg %p152
        $region38: #{tpu_custom_call.1} parent=31 // pred_check_branch
          %264 = sbr.rel (%p262) target = $region40
        $region39: #{tpu_custom_call.1} parent=31 // pred_region
          %s265 = sand.u32 %s142, 1
          %s266 = scalar_lea.sflag [#allocation8], %s265
          %s267 = sand.u32 %s142, 1
          %s268 = smul.addr %s267, 32
          %s269 = scalar_lea.vmem [#allocation7], %s268
          %s271 = ssub.s32 512, 512
          %272 = vsyncadd %s266, %s271
          %s273 = smul.addr %s22, 4
          %s274 = smul.addr %s273, 128
          %s275 = scalar_lea.hbm %s5, %s274
          %s276 = sshll.u32 %s269, 4
          %s277 = int_to_ptr.vmem [resolvable:$true] %s276
          %282 = dma.hbm_to_vmem [thread:$0]  %s275, 512, %s277, %s266, 256, 256, 16
        $region40: #{tpu_custom_call.1} parent=31 // pred_fallthru
          _
        // Predicated region
        $region41: #{tpu_custom_call.1} parent=31 // pred_check
          %p283 = pneg %p178
        $region42: #{tpu_custom_call.1} parent=31 // pred_check_branch
          %285 = sbr.rel (%p283) target = $region44
        $region43: #{tpu_custom_call.1} parent=31 // pred_region
          %p286 = scmp.lt.s32.totalorder %s22, 1
          %s287 = scalar_select %p286, %s22, 1
          %s288 = smul.addr %s287, 2
          %s289 = scalar_lea.vmem %s6, %s288
        $region44: #{tpu_custom_call.1} parent=31 // pred_fallthru
          _
      $region32: #{tpu_custom_call.1} parent=5 // pred_fallthru
        _
      %p290 = scmp.le.s32.totalorder 1, %s22
      %p291 = scmp.lt.s32.totalorder %s22, 3
      %p292 = pnand %p290, %p291
      %p293 = pneg %p292
      // Predicated region
      $region45: #{tpu_custom_call.1} parent=5 // pred_check
        _
      $region46: #{tpu_custom_call.1} parent=5 // pred_check_branch
        %295 = sbr.rel (%p292) target = $region48
      $region47: #{tpu_custom_call.1} parent=5 // pred_region
        %s296 = ssub.s32 %s22, 1
        %s297 = sand.u32 %s35, 1
        %s298 = scalar_lea.sflag [#allocation5], %s297
        %s299 = sand.u32 %s35, 1
        %s300 = smul.addr %s299, 32
        %s301 = scalar_lea.vmem [#allocation4], %s300
        // Predicated region
        $region49: #{tpu_custom_call.1} parent=47 // pred_check
          %p302 = pneg %p48
        $region50: #{tpu_custom_call.1} parent=47 // pred_check_branch
          %304 = sbr.rel (%p302) target = $region52
        $region51: #{tpu_custom_call.1} parent=47 // pred_region
          %305 = dma.done %s298, 512
        $region52: #{tpu_custom_call.1} parent=47 // pred_fallthru
          _
        %s306 = sand.u32 %s145, 1
        %s307 = scalar_lea.sflag [#allocation8], %s306
        %s308 = sand.u32 %s145, 1
        %s309 = smul.addr %s308, 32
        %s310 = scalar_lea.vmem [#allocation7], %s309
        // Predicated region
        $region53: #{tpu_custom_call.1} parent=47 // pred_check
          %p311 = pneg %p158
        $region54: #{tpu_custom_call.1} parent=47 // pred_check_branch
          %313 = sbr.rel (%p311) target = $region56
        $region55: #{tpu_custom_call.1} parent=47 // pred_region
          %314 = dma.done %s307, 512
        $region56: #{tpu_custom_call.1} parent=47 // pred_fallthru
          _
        %s315 = sand.u32 %s35, 1
        %s316 = scalar_lea.sflag [#allocation5], %s315
        %s317 = sand.u32 %s35, 1
        %s318 = smul.addr %s317, 32
        %s319 = scalar_lea.vmem [#allocation4], %s318
        %p320 = pneg %p48
        %p321 = pneg %p45
        %p322 = pneg %p69
        %p323 = pneg %p66
        %p324 = pneg %p90
        %p325 = pneg %p87
        %p326 = pneg %p111
        %p327 = pneg %p108
        %p328 = pneg %p132
        %p329 = pneg %p129
        %s330 = sand.u32 %s145, 1
        %s331 = scalar_lea.sflag [#allocation8], %s330
        %s332 = sand.u32 %s145, 1
        %s333 = smul.addr %s332, 32
        %s334 = scalar_lea.vmem [#allocation7], %s333
        %p335 = pneg %p158
        %p336 = pneg %p155
        %p337 = scmp.lt.s32.totalorder %s27, 1
        %s338 = scalar_select %p337, %s27, 1
        %s339 = smul.addr %s338, 2
        %s340 = scalar_lea.vmem %s6, %s339
        %p341 = pneg %p184
        %p342 = pneg %p181
        %p343 = pneg %p210
        %p344 = pneg %p207
        %s345 = sand.u32 %s197, 1
        %s346 = scalar_lea.sflag [#allocation6], %s345
        %s347 = sand.u32 %s197, 1
        %s348 = smul.addr %s347, 32
        %s349 = scalar_lea.vmem [#allocation9], %s348
        %p350 = scmp.lt.s32.totalorder %s27, 1
        %s351 = scalar_select %p350, %s27, 1
        %s352 = smul.addr %s351, 2
        %s353 = scalar_lea.vmem %s6, %s352
        %355 = vst [vmem:[#allocation2] sm:$0xf] 0
        %356 = vst [vmem:[#allocation2 + $0x10] sm:$0xf] 0
        %357 = vst [vmem:[#allocation2 + $0xc] sm:$0xf] 0
        %358 = vst [vmem:[#allocation2 + $0x1c] sm:$0xf] 0
        %359 = vst [vmem:[#allocation3] sm:$0xf] 0
        %360 = vst [vmem:[#allocation3 + $0x10] sm:$0xf] 0
        %361 = vst [vmem:[#allocation3 + $0xc] sm:$0xf] 0
        %362 = vst [vmem:[#allocation3 + $0x1c] sm:$0xf] 0
        %v363 = vld [vmem:[%s301] sm:$0xff]
        %v364 = vld [vmem:[%s301 + $0x8] sm:$0xff]
        %v365 = vld [vmem:[%s301 + $0x10] sm:$0xff]
        %v366 = vld [vmem:[%s301 + $0x18] sm:$0xff]
        %v367 = vpack.c.bf16 %v365, %v363
        %v368 = vpack.c.bf16 %v366, %v364
        %v371 = vunpack.c.l.b16 %v367
        %v372 = vunpack.c.l.b16 %v368
        %v373 = vunpack.c.h.b16 %v367
        %v374 = vunpack.c.h.b16 %v368
        %v375 = vpack.c.b16 %v372, %v371
        %v376 = vpack.c.b16 %v374, %v373
        %379 = vst [vmem:[#allocation2 + $0x4] sm:$0xff] %v375
        %380 = vst [vmem:[#allocation2 + $0x14] sm:$0xff] %v376
        %v381 = vlaneseq
        %v382 = vand.u32 %v381, 127
        %v383 = vadd.s32 %v382, 256
        %v384 = vadd.s32 %v382, 384
        %v385 = vsub.s32 %v382, 128
        %v386 = vsub.s32 %v383, 128
        %v387 = vsub.s32 %v384, 128
        %vm388 = vcmp.lt.s32.totalorder %v385, 0
        %v389 = vsub.s32 0, %v385
        %v390 = vsel %vm388, %v389, %v385
        %v391 = vshrl.u32 %v390, 4
        %v392 = vand.u32 %v390, 15
        %v393 = vsub.s32 0, %v392
        %v394 = vsel %vm388, %v393, %v392
        %vm395 = vcmp.lt.s32.totalorder %v382, 0
        %v396 = vsub.s32 0, %v382
        %v397 = vsel %vm395, %v396, %v382
        %v398 = vshrl.u32 %v397, 4
        %v399 = vand.u32 %v397, 15
        %v400 = vsub.s32 0, %v399
        %v401 = vsel %vm395, %v400, %v399
        %vm402 = vcmp.lt.s32.totalorder %v386, 0
        %v403 = vsub.s32 0, %v386
        %v404 = vsel %vm402, %v403, %v386
        %v405 = vshrl.u32 %v404, 4
        %v406 = vand.u32 %v404, 15
        %v407 = vsub.s32 0, %v406
        %v408 = vsel %vm402, %v407, %v406
        %vm409 = vcmp.lt.s32.totalorder %v387, 0
        %v410 = vsub.s32 0, %v387
        %v411 = vsel %vm409, %v410, %v387
        %v412 = vshrl.u32 %v411, 4
        %v413 = vand.u32 %v411, 15
        %v414 = vsub.s32 0, %v413
        %v415 = vsel %vm409, %v414, %v413
        %vm416 = vcmp.ne.s32.totalorder %v394, 0
        %vm417 = vcmp.ne.s32.totalorder %v401, 0
        %vm418 = vcmp.ne.s32.totalorder %v408, 0
        %vm419 = vcmp.ne.s32.totalorder %v415, 0
        %vm420 = vcmp.lt.s32.totalorder %v394, 0
        %vm421 = vcmp.lt.s32.totalorder %v401, 0
        %vm422 = vcmp.lt.s32.totalorder %v408, 0
        %vm423 = vcmp.lt.s32.totalorder %v415, 0
        %vm424 = vmand %vm420, %vm416
        %vm425 = vmand %vm421, %vm417
        %vm426 = vmand %vm422, %vm418
        %vm427 = vmand %vm423, %vm419
        %v428 = vadd.s32 %v394, 16
        %v429 = vadd.s32 %v401, 16
        %v430 = vadd.s32 %v408, 16
        %v431 = vadd.s32 %v415, 16
        %v432 = vsel %vm424, %v428, %v394
        %v433 = vsel %vm425, %v429, %v401
        %v434 = vsel %vm426, %v430, %v408
        %v435 = vsel %vm427, %v431, %v415
        %vm436 = vcmp.ne.s32.totalorder %v432, 15
        %vm437 = vcmp.ne.s32.totalorder %v433, 15
        %vm438 = vcmp.ne.s32.totalorder %v434, 15
        %vm439 = vcmp.ne.s32.totalorder %v435, 15
        %vm440 = vcmp.ne.s32.totalorder %v432, 0
        %vm441 = vcmp.ne.s32.totalorder %v433, 0
        %vm442 = vcmp.ne.s32.totalorder %v434, 0
        %vm443 = vcmp.ne.s32.totalorder %v435, 0
        %v444 = vld [vmem:[%s1] sm:$0xff]
        %v445 = vld [vmem:[%s1 + $0x8] sm:$0xff]
        %v446 = vld [vmem:[#allocation2] sm:$0xff]
        %v447 = vld [vmem:[#allocation2 + $0x8] sm:$0xff]
        %v448 = vld [vmem:[#allocation2 + $0x10] sm:$0xff]
        %v449 = vld [vmem:[#allocation2 + $0x18] sm:$0xff]
        %v450 = vsel %vm436, 1, 0
        %v451 = vsel %vm437, 1, 0
        %v452 = vsel %vm438, 1, 0
        %v453 = vsel %vm439, 1, 0
        %vm454 = vcmp.eq.s32.totalorder %v450, 1
        %vm455 = vcmp.eq.s32.totalorder %v451, 1
        %vm456 = vcmp.eq.s32.totalorder %v452, 1
        %vm457 = vcmp.eq.s32.totalorder %v453, 1
        %vm458 = vmpackc.low %vm455, %vm454
        %vm459 = vmpackc.low %vm457, %vm456
        %v460 = vsel %vm458, %v446, 0
        %v461 = vsel %vm459, %v447, 0
        %v462 = vsel %vm458, %v448, 0
        %v463 = vsel %vm459, %v449, 0
        %v464 = vsel %vm440, 1, 0
        %v465 = vsel %vm441, 1, 0
        %v466 = vsel %vm442, 1, 0
        %v467 = vsel %vm443, 1, 0
        %vm468 = vcmp.eq.s32.totalorder %v464, 1
        %vm469 = vcmp.eq.s32.totalorder %v465, 1
        %vm470 = vcmp.eq.s32.totalorder %v466, 1
        %vm471 = vcmp.eq.s32.totalorder %v467, 1
        %vm472 = vmpackc.low %vm469, %vm468
        %vm473 = vmpackc.low %vm471, %vm470
        %v474 = vsel %vm472, %v446, 0
        %v475 = vsel %vm473, %v447, 0
        %v476 = vsel %vm472, %v448, 0
        %v477 = vsel %vm473, %v449, 0
        %v482 = vunpack.c.l.b16 %v460
        %v483 = vunpack.c.h.b16 %v460
        %v484 = vunpack.c.l.b16 %v461
        %v485 = vunpack.c.l.b16 %v462
        %v486 = vunpack.c.h.b16 %v462
        %v487 = vunpack.c.l.b16 %v463
        %v488 = vpack.c.b16 %v485, %v482
        %v489 = vpack.c.b16 %v486, %v483
        %v490 = vpack.c.b16 %v487, %v484
        %v495 = vunpack.c.l.b16 %v446
        %v496 = vunpack.c.h.b16 %v446
        %v497 = vunpack.c.l.b16 %v447
        %v498 = vunpack.c.l.b16 %v448
        %v499 = vunpack.c.h.b16 %v448
        %v500 = vunpack.c.l.b16 %v449
        %v501 = vpack.c.b16 %v498, %v495
        %v502 = vpack.c.b16 %v499, %v496
        %v503 = vpack.c.b16 %v500, %v497
        %504 = vrot.lane.b32.xlu0 %v501, 127
        %v505 = vpop.permute.xlu0 %504
        %506 = vrot.lane.b32.xlu0 %v502, 127
        %v507 = vpop.permute.xlu0 %506
        %508 = vrot.lane.b32.xlu0 %v503, 127
        %v509 = vpop.permute.xlu0 %508
        %vm510 = vcmask 1039360
        %v511 = vsel %vm510, %v505, %v507
        %v512 = vsel %vm510, %v507, %v509
        %v517 = vunpack.c.l.b16 %v474
        %v518 = vunpack.c.h.b16 %v474
        %v519 = vunpack.c.l.b16 %v475
        %v520 = vunpack.c.l.b16 %v476
        %v521 = vunpack.c.h.b16 %v476
        %v522 = vunpack.c.l.b16 %v477
        %v523 = vpack.c.b16 %v520, %v517
        %v524 = vpack.c.b16 %v521, %v518
        %v525 = vpack.c.b16 %v522, %v519
        %526 = vrot.lane.b32.xlu0 %v523, 126
        %v527 = vpop.permute.xlu0 %526
        %528 = vrot.lane.b32.xlu0 %v524, 126
        %v529 = vpop.permute.xlu0 %528
        %530 = vrot.lane.b32.xlu0 %v525, 126
        %v531 = vpop.permute.xlu0 %530
        %vm532 = vcmask 1031168
        %v533 = vsel %vm532, %v527, %v529
        %v534 = vsel %vm532, %v529, %v531
        %535 = vrot.lane.b32.xlu0 %v488, 112
        %v536 = vpop.permute.xlu0 %535
        %537 = vrot.lane.b32.xlu0 %v489, 112
        %v538 = vpop.permute.xlu0 %537
        %539 = vrot.lane.b32.xlu0 %v490, 112
        %v540 = vpop.permute.xlu0 %539
        %vm541 = vcmask 916480
        %v542 = vsel %vm541, %v536, %v538
        %v543 = vsel %vm541, %v538, %v540
        %544 = vrot.lane.b32.xlu0 %v502, 111
        %v545 = vpop.permute.xlu0 %544
        %546 = vrot.lane.b32.xlu0 %v503, 111
        %v547 = vpop.permute.xlu0 %546
        %vm548 = vcmask 908288
        %v549 = vsel %vm548, %v545, %v547
        %v550 = vunpack.c.h.b16 %v475
        %v551 = vunpack.c.h.b16 %v477
        %v552 = vpack.c.b16 %v551, %v550
        %553 = vrot.lane.b32.xlu0 %v524, 110
        %v554 = vpop.permute.xlu0 %553
        %555 = vrot.lane.b32.xlu0 %v525, 110
        %v556 = vpop.permute.xlu0 %555
        %557 = vrot.lane.b32.xlu0 %v552, 110
        %v558 = vpop.permute.xlu0 %557
        %vm559 = vcmask 900096
        %v560 = vsel %vm559, %v554, %v556
        %v561 = vsel %vm559, %v556, %v558
        %v562 = vunpack.c.h.b16 %v461
        %v563 = vunpack.c.h.b16 %v463
        %v564 = vpack.c.b16 %v563, %v562
        %565 = vrot.lane.b32.xlu0 %v489, 96
        %v566 = vpop.permute.xlu0 %565
        %567 = vrot.lane.b32.xlu0 %v490, 96
        %v568 = vpop.permute.xlu0 %567
        %569 = vrot.lane.b32.xlu0 %v564, 96
        %v570 = vpop.permute.xlu0 %569
        %vm571 = vcmask 785408
        %v572 = vsel %vm571, %v566, %v568
        %v573 = vsel %vm571, %v568, %v570
        %v574 = vunpack.c.h.b16 %v447
        %v575 = vunpack.c.h.b16 %v449
        %v576 = vpack.c.b16 %v575, %v574
        %577 = vrot.lane.b32.xlu0 %v502, 95
        %v578 = vpop.permute.xlu0 %577
        %579 = vrot.lane.b32.xlu0 %v503, 95
        %v580 = vpop.permute.xlu0 %579
        %581 = vrot.lane.b32.xlu0 %v576, 95
        %v582 = vpop.permute.xlu0 %581
        %vm583 = vcmask 777216
        %v584 = vsel %vm583, %v578, %v580
        %v585 = vsel %vm583, %v580, %v582
        %586 = vrot.lane.b32.xlu0 %v524, 94
        %v587 = vpop.permute.xlu0 %586
        %588 = vrot.lane.b32.xlu0 %v525, 94
        %v589 = vpop.permute.xlu0 %588
        %590 = vrot.lane.b32.xlu0 %v552, 94
        %v591 = vpop.permute.xlu0 %590
        %vm592 = vcmask 769024
        %v593 = vsel %vm592, %v587, %v589
        %v594 = vsel %vm592, %v589, %v591
        %v595 = vld [vmem:[%s2] sm:$0xff]
        %v596 = vld [vmem:[%s2 + $0x8] sm:$0xff]
        %598 = vset.pattern.permute.xlu0 0
        %599 = vperm.xlu0 %598, %v595
        %v600 = vpop.permute.xlu0 %599
        %603 = vset.pattern.permute.xlu0 0
        %604 = vperm.xlu0 %603, %v596
        %v605 = vpop.permute.xlu0 %604
        %v609 = vunpack.c.l.b16 %v444
        %v610 = vunpack.c.h.b16 %v444
        %v611 = vunpack.c.l.b16 %v445
        %v612 = vunpack.c.h.b16 %v445
        %v613 = vpack.c.b16 %v611, %v609
        %v614 = vpack.c.b16 %v612, %v610
        %616 = vrot.lane.b32.xlu0 %v488, 17
        %v617 = vpop.permute.xlu0 %616
        %618 = vrot.lane.b32.xlu0 %v489, 17
        %v619 = vpop.permute.xlu0 %618
        %620 = vrot.lane.b32.xlu0 %v490, 17
        %v621 = vpop.permute.xlu0 %620
        %622 = vrot.lane.b32.xlu0 %v511, 17
        %v623 = vpop.permute.xlu0 %622
        %624 = vrot.lane.b32.xlu0 %v512, 17
        %v625 = vpop.permute.xlu0 %624
        %626 = vrot.lane.b32.xlu0 %v509, 17
        %v627 = vpop.permute.xlu0 %626
        %628 = vrot.lane.b32.xlu0 %v533, 17
        %v629 = vpop.permute.xlu0 %628
        %630 = vrot.lane.b32.xlu0 %v534, 17
        %v631 = vpop.permute.xlu0 %630
        %632 = vrot.lane.b32.xlu0 %v531, 17
        %v633 = vpop.permute.xlu0 %632
        %634 = vrot.lane.b32.xlu0 %v542, 17
        %v635 = vpop.permute.xlu0 %634
        %636 = vrot.lane.b32.xlu0 %v543, 17
        %v637 = vpop.permute.xlu0 %636
        %638 = vrot.lane.b32.xlu0 %v540, 17
        %v639 = vpop.permute.xlu0 %638
        %640 = vrot.lane.b32.xlu0 %v545, 17
        %v641 = vpop.permute.xlu0 %640
        %642 = vrot.lane.b32.xlu0 %v549, 17
        %v643 = vpop.permute.xlu0 %642
        %644 = vrot.lane.b32.xlu0 %v547, 17
        %v645 = vpop.permute.xlu0 %644
        %646 = vrot.lane.b32.xlu0 %v554, 17
        %v647 = vpop.permute.xlu0 %646
        %648 = vrot.lane.b32.xlu0 %v560, 17
        %v649 = vpop.permute.xlu0 %648
        %650 = vrot.lane.b32.xlu0 %v561, 17
        %v651 = vpop.permute.xlu0 %650
        %652 = vrot.lane.b32.xlu0 %v566, 17
        %v653 = vpop.permute.xlu0 %652
        %654 = vrot.lane.b32.xlu0 %v572, 17
        %v655 = vpop.permute.xlu0 %654
        %656 = vrot.lane.b32.xlu0 %v573, 17
        %v657 = vpop.permute.xlu0 %656
        %658 = vrot.lane.b32.xlu0 %v578, 17
        %v659 = vpop.permute.xlu0 %658
        %660 = vrot.lane.b32.xlu0 %v584, 17
        %v661 = vpop.permute.xlu0 %660
        %662 = vrot.lane.b32.xlu0 %v585, 17
        %v663 = vpop.permute.xlu0 %662
        %664 = vrot.lane.b32.xlu0 %v587, 17
        %v665 = vpop.permute.xlu0 %664
        %666 = vrot.lane.b32.xlu0 %v593, 17
        %v667 = vpop.permute.xlu0 %666
        %668 = vrot.lane.b32.xlu0 %v594, 17
        %v669 = vpop.permute.xlu0 %668
        %vm670 = vcmask 138240
        %v671 = vsel %vm670, %v617, %v619
        %v672 = vsel %vm670, %v619, %v621
        %v673 = vsel %vm670, %v623, %v625
        %v674 = vsel %vm670, %v625, %v627
        %v675 = vsel %vm670, %v629, %v631
        %v676 = vsel %vm670, %v631, %v633
        %v677 = vsel %vm670, %v635, %v637
        %v678 = vsel %vm670, %v637, %v639
        %v679 = vsel %vm670, %v641, %v643
        %v680 = vsel %vm670, %v643, %v645
        %v681 = vsel %vm670, %v647, %v649
        %v682 = vsel %vm670, %v649, %v651
        %v683 = vsel %vm670, %v653, %v655
        %v684 = vsel %vm670, %v655, %v657
        %v685 = vsel %vm670, %v659, %v661
        %v686 = vsel %vm670, %v661, %v663
        %v687 = vsel %vm670, %v665, %v667
        %v688 = vsel %vm670, %v667, %v669
        %vm707 = vcmask 130048
        %v709 = vsel %vm707, %v614, 0
        %711 = vmatprep.subr.bf16.mxu0 %v686
        %712 = vmatpush1.bf16.msra.mxu0 %v685
        %713 = vmatprep.subr.bf16.mxu0 %v684
        %714 = vmatpush1.bf16.msra.mxu0 %v683
        %715 = vmatprep.subr.bf16.mxu0 %v682
        %716 = vmatpush1.bf16.msra.mxu0 %v681
        %717 = vmatprep.subr.bf16.mxu0 %v680
        %718 = vmatpush1.bf16.msra.mxu0 %v679
        %719 = vmatprep.subr.bf16.mxu0 %v678
        %720 = vmatpush1.bf16.msra.mxu0 %v677
        %721 = vmatprep.subr.bf16.mxu0 %v676
        %722 = vmatpush1.bf16.msra.mxu0 %v675
        %723 = vmatprep.subr.bf16.mxu0 %v674
        %724 = vmatpush1.bf16.msra.mxu0 %v673
        %725 = vmatprep.subr.bf16.mxu0 %v672
        %726 = vmatpush1.bf16.msra.mxu0 %v671
        %727 = vmatprep.subr.bf16.mxu0 0
        %728 = vmatpush2.bf16.msra.mxu0 0
        %729 = vmatprep.subr.bf16.mxu0 0
        %730 = vmatpush2.bf16.msra.mxu0 0
        %731 = vmatprep.subr.bf16.mxu0 0
        %732 = vmatpush2.bf16.msra.mxu0 0
        %733 = vmatprep.subr.bf16.mxu0 0
        %734 = vmatpush2.bf16.msra.mxu0 0
        %735 = vmatprep.subr.bf16.mxu0 0
        %736 = vmatpush2.bf16.msra.mxu0 0
        %737 = vmatprep.subr.bf16.mxu0 0
        %738 = vmatpush2.bf16.msra.mxu0 0
        %739 = vmatprep.subr.bf16.mxu0 0
        %740 = vmatpush2.bf16.msra.mxu0 0
        %741 = vmatprep.subr.bf16.mxu0 %v688
        %742 = vmatpush2.bf16.msra.mxu0 %v687
        %743 = vmatprep.mubr.bf16.mxu0 %v709
        %744 = vmatmul.mubr.bf16.gmra.mxu0 %v613
        %v745 = vpop.f32.mrf.mxu0
        %v746 = vadd.f32 %v600, %v745
        %v747 = vpop.f32.mrf.mxu0
        %v748 = vadd.f32 %v600, %v747
        %v749 = vpop.f32.mrf.mxu0
        %v750 = vadd.f32 %v605, %v749
        %v751 = vpop.f32.mrf.mxu0
        %v752 = vadd.f32 %v605, %v751
        %753 = vdwg.mxu0
        %v754 = vmax.f32 %v746, 0.0
        %v755 = vmax.f32 %v748, 0.0
        %v756 = vmax.f32 %v750, 0.0
        %v757 = vmax.f32 %v752, 0.0
        %v758 = vpack.c.bf16 %v756, %v754
        %v759 = vpack.c.bf16 %v757, %v755
        %v762 = vunpack.c.l.b16 %v758
        %v763 = vunpack.c.l.b16 %v759
        %v764 = vunpack.c.h.b16 %v758
        %v765 = vunpack.c.h.b16 %v759
        %v766 = vpack.c.b16 %v763, %v762
        %v767 = vpack.c.b16 %v765, %v764
        %770 = vst [vmem:[#allocation3 + $0x4] sm:$0xff] %v766
        %771 = vst [vmem:[#allocation3 + $0x14] sm:$0xff] %v767
        %v772 = vld [vmem:[%s3] sm:$0xff]
        %v773 = vld [vmem:[%s3 + $0x8] sm:$0xff]
        %v774 = vld [vmem:[#allocation3] sm:$0xff]
        %v775 = vld [vmem:[#allocation3 + $0x8] sm:$0xff]
        %v776 = vld [vmem:[#allocation3 + $0x10] sm:$0xff]
        %v777 = vld [vmem:[#allocation3 + $0x18] sm:$0xff]
        %v778 = vsel %vm458, %v774, 0
        %v779 = vsel %vm459, %v775, 0
        %v780 = vsel %vm458, %v776, 0
        %v781 = vsel %vm459, %v777, 0
        %v782 = vsel %vm472, %v774, 0
        %v783 = vsel %vm473, %v775, 0
        %v784 = vsel %vm472, %v776, 0
        %v785 = vsel %vm473, %v777, 0
        %v790 = vunpack.c.l.b16 %v778
        %v791 = vunpack.c.h.b16 %v778
        %v792 = vunpack.c.l.b16 %v779
        %v793 = vunpack.c.l.b16 %v780
        %v794 = vunpack.c.h.b16 %v780
        %v795 = vunpack.c.l.b16 %v781
        %v796 = vpack.c.b16 %v793, %v790
        %v797 = vpack.c.b16 %v794, %v791
        %v798 = vpack.c.b16 %v795, %v792
        %v803 = vunpack.c.l.b16 %v774
        %v804 = vunpack.c.h.b16 %v774
        %v805 = vunpack.c.l.b16 %v775
        %v806 = vunpack.c.l.b16 %v776
        %v807 = vunpack.c.h.b16 %v776
        %v808 = vunpack.c.l.b16 %v777
        %v809 = vpack.c.b16 %v806, %v803
        %v810 = vpack.c.b16 %v807, %v804
        %v811 = vpack.c.b16 %v808, %v805
        %812 = vrot.lane.b32.xlu0 %v809, 127
        %v813 = vpop.permute.xlu0 %812
        %814 = vrot.lane.b32.xlu0 %v810, 127
        %v815 = vpop.permute.xlu0 %814
        %816 = vrot.lane.b32.xlu0 %v811, 127
        %v817 = vpop.permute.xlu0 %816
        %v818 = vsel %vm510, %v813, %v815
        %v819 = vsel %vm510, %v815, %v817
        %v824 = vunpack.c.l.b16 %v782
        %v825 = vunpack.c.h.b16 %v782
        %v826 = vunpack.c.l.b16 %v783
        %v827 = vunpack.c.l.b16 %v784
        %v828 = vunpack.c.h.b16 %v784
        %v829 = vunpack.c.l.b16 %v785
        %v830 = vpack.c.b16 %v827, %v824
        %v831 = vpack.c.b16 %v828, %v825
        %v832 = vpack.c.b16 %v829, %v826
        %833 = vrot.lane.b32.xlu0 %v830, 126
        %v834 = vpop.permute.xlu0 %833
        %835 = vrot.lane.b32.xlu0 %v831, 126
        %v836 = vpop.permute.xlu0 %835
        %837 = vrot.lane.b32.xlu0 %v832, 126
        %v838 = vpop.permute.xlu0 %837
        %v839 = vsel %vm532, %v834, %v836
        %v840 = vsel %vm532, %v836, %v838
        %841 = vrot.lane.b32.xlu0 %v796, 112
        %v842 = vpop.permute.xlu0 %841
        %843 = vrot.lane.b32.xlu0 %v797, 112
        %v844 = vpop.permute.xlu0 %843
        %845 = vrot.lane.b32.xlu0 %v798, 112
        %v846 = vpop.permute.xlu0 %845
        %v847 = vsel %vm541, %v842, %v844
        %v848 = vsel %vm541, %v844, %v846
        %849 = vrot.lane.b32.xlu0 %v810, 111
        %v850 = vpop.permute.xlu0 %849
        %851 = vrot.lane.b32.xlu0 %v811, 111
        %v852 = vpop.permute.xlu0 %851
        %v853 = vsel %vm548, %v850, %v852
        %v854 = vunpack.c.h.b16 %v783
        %v855 = vunpack.c.h.b16 %v785
        %v856 = vpack.c.b16 %v855, %v854
        %857 = vrot.lane.b32.xlu0 %v831, 110
        %v858 = vpop.permute.xlu0 %857
        %859 = vrot.lane.b32.xlu0 %v832, 110
        %v860 = vpop.permute.xlu0 %859
        %861 = vrot.lane.b32.xlu0 %v856, 110
        %v862 = vpop.permute.xlu0 %861
        %v863 = vsel %vm559, %v858, %v860
        %v864 = vsel %vm559, %v860, %v862
        %v865 = vunpack.c.h.b16 %v779
        %v866 = vunpack.c.h.b16 %v781
        %v867 = vpack.c.b16 %v866, %v865
        %868 = vrot.lane.b32.xlu0 %v797, 96
        %v869 = vpop.permute.xlu0 %868
        %870 = vrot.lane.b32.xlu0 %v798, 96
        %v871 = vpop.permute.xlu0 %870
        %872 = vrot.lane.b32.xlu0 %v867, 96
        %v873 = vpop.permute.xlu0 %872
        %v874 = vsel %vm571, %v869, %v871
        %v875 = vsel %vm571, %v871, %v873
        %v876 = vunpack.c.h.b16 %v775
        %v877 = vunpack.c.h.b16 %v777
        %v878 = vpack.c.b16 %v877, %v876
        %879 = vrot.lane.b32.xlu0 %v810, 95
        %v880 = vpop.permute.xlu0 %879
        %881 = vrot.lane.b32.xlu0 %v811, 95
        %v882 = vpop.permute.xlu0 %881
        %883 = vrot.lane.b32.xlu0 %v878, 95
        %v884 = vpop.permute.xlu0 %883
        %v885 = vsel %vm583, %v880, %v882
        %v886 = vsel %vm583, %v882, %v884
        %887 = vrot.lane.b32.xlu0 %v831, 94
        %v888 = vpop.permute.xlu0 %887
        %889 = vrot.lane.b32.xlu0 %v832, 94
        %v890 = vpop.permute.xlu0 %889
        %891 = vrot.lane.b32.xlu0 %v856, 94
        %v892 = vpop.permute.xlu0 %891
        %v893 = vsel %vm592, %v888, %v890
        %v894 = vsel %vm592, %v890, %v892
        %v895 = vld [vmem:[%s4] sm:$0xff]
        %v896 = vld [vmem:[%s4 + $0x8] sm:$0xff]
        %898 = vset.pattern.permute.xlu0 0
        %899 = vperm.xlu0 %898, %v895
        %v900 = vpop.permute.xlu0 %899
        %903 = vset.pattern.permute.xlu0 0
        %904 = vperm.xlu0 %903, %v896
        %v905 = vpop.permute.xlu0 %904
        %v909 = vunpack.c.l.b16 %v772
        %v910 = vunpack.c.h.b16 %v772
        %v911 = vunpack.c.l.b16 %v773
        %v912 = vunpack.c.h.b16 %v773
        %v913 = vpack.c.b16 %v911, %v909
        %v914 = vpack.c.b16 %v912, %v910
        %916 = vrot.lane.b32.xlu0 %v796, 17
        %v917 = vpop.permute.xlu0 %916
        %918 = vrot.lane.b32.xlu0 %v797, 17
        %v919 = vpop.permute.xlu0 %918
        %920 = vrot.lane.b32.xlu0 %v798, 17
        %v921 = vpop.permute.xlu0 %920
        %922 = vrot.lane.b32.xlu0 %v818, 17
        %v923 = vpop.permute.xlu0 %922
        %924 = vrot.lane.b32.xlu0 %v819, 17
        %v925 = vpop.permute.xlu0 %924
        %926 = vrot.lane.b32.xlu0 %v817, 17
        %v927 = vpop.permute.xlu0 %926
        %928 = vrot.lane.b32.xlu0 %v839, 17
        %v929 = vpop.permute.xlu0 %928
        %930 = vrot.lane.b32.xlu0 %v840, 17
        %v931 = vpop.permute.xlu0 %930
        %932 = vrot.lane.b32.xlu0 %v838, 17
        %v933 = vpop.permute.xlu0 %932
        %934 = vrot.lane.b32.xlu0 %v847, 17
        %v935 = vpop.permute.xlu0 %934
        %936 = vrot.lane.b32.xlu0 %v848, 17
        %v937 = vpop.permute.xlu0 %936
        %938 = vrot.lane.b32.xlu0 %v846, 17
        %v939 = vpop.permute.xlu0 %938
        %940 = vrot.lane.b32.xlu0 %v850, 17
        %v941 = vpop.permute.xlu0 %940
        %942 = vrot.lane.b32.xlu0 %v853, 17
        %v943 = vpop.permute.xlu0 %942
        %944 = vrot.lane.b32.xlu0 %v852, 17
        %v945 = vpop.permute.xlu0 %944
        %946 = vrot.lane.b32.xlu0 %v858, 17
        %v947 = vpop.permute.xlu0 %946
        %948 = vrot.lane.b32.xlu0 %v863, 17
        %v949 = vpop.permute.xlu0 %948
        %950 = vrot.lane.b32.xlu0 %v864, 17
        %v951 = vpop.permute.xlu0 %950
        %952 = vrot.lane.b32.xlu0 %v869, 17
        %v953 = vpop.permute.xlu0 %952
        %954 = vrot.lane.b32.xlu0 %v874, 17
        %v955 = vpop.permute.xlu0 %954
        %956 = vrot.lane.b32.xlu0 %v875, 17
        %v957 = vpop.permute.xlu0 %956
        %958 = vrot.lane.b32.xlu0 %v880, 17
        %v959 = vpop.permute.xlu0 %958
        %960 = vrot.lane.b32.xlu0 %v885, 17
        %v961 = vpop.permute.xlu0 %960
        %962 = vrot.lane.b32.xlu0 %v886, 17
        %v963 = vpop.permute.xlu0 %962
        %964 = vrot.lane.b32.xlu0 %v888, 17
        %v965 = vpop.permute.xlu0 %964
        %966 = vrot.lane.b32.xlu0 %v893, 17
        %v967 = vpop.permute.xlu0 %966
        %968 = vrot.lane.b32.xlu0 %v894, 17
        %v969 = vpop.permute.xlu0 %968
        %v970 = vsel %vm670, %v917, %v919
        %v971 = vsel %vm670, %v919, %v921
        %v972 = vsel %vm670, %v923, %v925
        %v973 = vsel %vm670, %v925, %v927
        %v974 = vsel %vm670, %v929, %v931
        %v975 = vsel %vm670, %v931, %v933
        %v976 = vsel %vm670, %v935, %v937
        %v977 = vsel %vm670, %v937, %v939
        %v978 = vsel %vm670, %v941, %v943
        %v979 = vsel %vm670, %v943, %v945
        %v980 = vsel %vm670, %v947, %v949
        %v981 = vsel %vm670, %v949, %v951
        %v982 = vsel %vm670, %v953, %v955
        %v983 = vsel %vm670, %v955, %v957
        %v984 = vsel %vm670, %v959, %v961
        %v985 = vsel %vm670, %v961, %v963
        %v986 = vsel %vm670, %v965, %v967
        %v987 = vsel %vm670, %v967, %v969
        %v1007 = vsel %vm707, %v914, 0
        %1009 = vmatprep.subr.bf16.mxu0 %v985
        %1010 = vmatpush1.bf16.msra.mxu0 %v984
        %1011 = vmatprep.subr.bf16.mxu0 %v983
        %1012 = vmatpush1.bf16.msra.mxu0 %v982
        %1013 = vmatprep.subr.bf16.mxu0 %v981
        %1014 = vmatpush1.bf16.msra.mxu0 %v980
        %1015 = vmatprep.subr.bf16.mxu0 %v979
        %1016 = vmatpush1.bf16.msra.mxu0 %v978
        %1017 = vmatprep.subr.bf16.mxu0 %v977
        %1018 = vmatpush1.bf16.msra.mxu0 %v976
        %1019 = vmatprep.subr.bf16.mxu0 %v975
        %1020 = vmatpush1.bf16.msra.mxu0 %v974
        %1021 = vmatprep.subr.bf16.mxu0 %v973
        %1022 = vmatpush1.bf16.msra.mxu0 %v972
        %1023 = vmatprep.subr.bf16.mxu0 %v971
        %1024 = vmatpush1.bf16.msra.mxu0 %v970
        %1025 = vmatprep.subr.bf16.mxu0 0
        %1026 = vmatpush2.bf16.msra.mxu0 0
        %1027 = vmatprep.subr.bf16.mxu0 0
        %1028 = vmatpush2.bf16.msra.mxu0 0
        %1029 = vmatprep.subr.bf16.mxu0 0
        %1030 = vmatpush2.bf16.msra.mxu0 0
        %1031 = vmatprep.subr.bf16.mxu0 0
        %1032 = vmatpush2.bf16.msra.mxu0 0
        %1033 = vmatprep.subr.bf16.mxu0 0
        %1034 = vmatpush2.bf16.msra.mxu0 0
        %1035 = vmatprep.subr.bf16.mxu0 0
        %1036 = vmatpush2.bf16.msra.mxu0 0
        %1037 = vmatprep.subr.bf16.mxu0 0
        %1038 = vmatpush2.bf16.msra.mxu0 0
        %1039 = vmatprep.subr.bf16.mxu0 %v987
        %1040 = vmatpush2.bf16.msra.mxu0 %v986
        %1041 = vmatprep.mubr.bf16.mxu0 %v1007
        %1042 = vmatmul.mubr.bf16.gmra.mxu0 %v913
        %v1043 = vpop.f32.mrf.mxu0
        %v1044 = vadd.f32 %v900, %v1043
        %v1045 = vpop.f32.mrf.mxu0
        %v1046 = vadd.f32 %v900, %v1045
        %v1047 = vpop.f32.mrf.mxu0
        %v1048 = vadd.f32 %v905, %v1047
        %v1049 = vpop.f32.mrf.mxu0
        %v1050 = vadd.f32 %v905, %v1049
        %1051 = vdwg.mxu0
        %v1052 = vadd.f32 %v1044, %v363
        %v1053 = vadd.f32 %v1046, %v364
        %v1054 = vadd.f32 %v1048, %v365
        %v1055 = vadd.f32 %v1050, %v366
        %v1056 = vmax.f32 %v1052, 0.0
        %v1057 = vmax.f32 %v1053, 0.0
        %v1058 = vmax.f32 %v1054, 0.0
        %v1059 = vmax.f32 %v1055, 0.0
        %v1060 = vld [vmem:[%s310] sm:$0xff]
        %v1061 = vld [vmem:[%s310 + $0x8] sm:$0xff]
        %v1062 = vld [vmem:[%s310 + $0x10] sm:$0xff]
        %v1063 = vld [vmem:[%s310 + $0x18] sm:$0xff]
        %v1064 = vadd.f32 %v1056, %v1060
        %v1065 = vadd.f32 %v1057, %v1061
        %v1066 = vadd.f32 %v1058, %v1062
        %v1067 = vadd.f32 %v1059, %v1063
        %v1068 = vld [vmem:[%s353] sm:$0x3]
        %v1070 = vlaneseq
        %v1071 = vshrl.u32 %v1070, 7
        %v1072 = vsub.s32 0, %v1071
        %v1073 = vrot.slane %v1068, %v1072
        %v1074 = vlaneseq
        %v1075 = vshrl.u32 %v1074, 7
        %v1076 = vsub.s32 1, %v1075
        %v1077 = vrot.slane %v1068, %v1076
        %v1080 = vmul.f32 %v1064, %v1073
        %v1081 = vmul.f32 %v1065, %v1077
        %v1082 = vmul.f32 %v1066, %v1073
        %v1083 = vmul.f32 %v1067, %v1077
        %1084 = vst [vmem:[%s349] sm:$0xff] %v1080
        %1085 = vst [vmem:[%s349 + $0x8] sm:$0xff] %v1081
        %1086 = vst [vmem:[%s349 + $0x10] sm:$0xff] %v1082
        %1087 = vst [vmem:[%s349 + $0x18] sm:$0xff] %v1083
        %s1088 = sand.u32 %s197, 1
        %s1089 = scalar_lea.sflag [#allocation6], %s1088
        %s1090 = sand.u32 %s197, 1
        %s1091 = smul.addr %s1090, 32
        %s1092 = scalar_lea.vmem [#allocation9], %s1091
        // Predicated region
        $region57: #{tpu_custom_call.1} parent=47 // pred_check
          %p1093 = pneg %p207
        $region58: #{tpu_custom_call.1} parent=47 // pred_check_branch
          %1095 = sbr.rel (%p1093) target = $region60
        $region59: #{tpu_custom_call.1} parent=47 // pred_region
          %s1097 = ssub.s32 512, 512
          %1098 = vsyncadd %s1089, %s1097
          %s1099 = smul.addr %s27, 4
          %s1100 = smul.addr %s1099, 128
          %s1101 = scalar_lea.hbm %s7, %s1100
          %s1102 = sshll.u32 %s1092, 4
          %s1103 = int_to_ptr.vmem [resolvable:$true] %s1102
          %1108 = dma.vmem_to_hbm [thread:$0]  %s1103, 512, %s1101, %s1089, 256, 256, 16
        $region60: #{tpu_custom_call.1} parent=47 // pred_fallthru
          _
      $region48: #{tpu_custom_call.1} parent=5 // pred_fallthru
        _
      %p1109 = scmp.le.s32.totalorder 2, %s22
      // Predicated region
      $region61: #{tpu_custom_call.1} parent=5 // pred_check
        %p1110 = pneg %p1109
      $region62: #{tpu_custom_call.1} parent=5 // pred_check_branch
        %1112 = sbr.rel (%p1110) target = $region64
      $region63: #{tpu_custom_call.1} parent=5 // pred_region
        %s1113 = ssub.s32 %s22, 2
        // Predicated region
        $region65: #{tpu_custom_call.1} parent=63 // pred_check
          %p1114 = pneg %p213
        $region66: #{tpu_custom_call.1} parent=63 // pred_check_branch
          %1116 = sbr.rel (%p1114) target = $region68
        $region67: #{tpu_custom_call.1} parent=63 // pred_region
          %s1117 = sand.u32 %s198, 1
          %s1118 = scalar_lea.sflag [#allocation6], %s1117
          %s1119 = sand.u32 %s198, 1
          %s1120 = smul.addr %s1119, 32
          %s1121 = scalar_lea.vmem [#allocation9], %s1120
          %1122 = dma.done %s1118, 512
        $region68: #{tpu_custom_call.1} parent=63 // pred_fallthru
          _
      $region64: #{tpu_custom_call.1} parent=5 // pred_fallthru
        _
    $region6: #{tpu_custom_call.1} parent=1 // loop_footer
      %s26 = sadd.s32 1, %s22
    $region7: #{tpu_custom_call.1} parent=1 // loop_footer_branch
      %21 = sbr.rel target = $region3
    $region8: #{tpu_custom_call.1} parent=1 // loop_exit
      _
    %1123 = vsyncpa [#allocation5], 1
    %s1124 = scalar_lea.sflag [#allocation5], 1
    %1125 = vsyncpa %s1124, 1
    %1126 = vsyncpa [#allocation8], 1
    %s1127 = scalar_lea.sflag [#allocation8], 1
    %1128 = vsyncpa %s1127, 1
    %1129 = vsyncpa [#allocation6], 1
    %s1130 = scalar_lea.sflag [#allocation6], 1
    %1131 = vsyncpa %s1130, 1

</llo_original>
